<compile_context>
chip_gen: v7x
topology: tpu7x:2x2x1
jax: 0.10.0
libtpu: 0.0.40
codegen_flags: <defaults>
</compile_context>

<pallas_src>
import functools
import math

import jax
import jax.numpy as jnp
import numpy as np
from jax.experimental import pallas as pl
from jax.experimental.pallas import tpu as pltpu


# ----------------------------- in-kernel helpers -----------------------------
def _layernorm(x, gamma, beta, eps=1e-5):
    # matches the custom torch LayerNorm: mean / biased var over last dim
    mean = jnp.mean(x, axis=-1, keepdims=True)
    xc = x - mean
    var = jnp.mean(xc * xc, axis=-1, keepdims=True)
    return gamma * (xc * jax.lax.rsqrt(var + eps)) + beta


def _gelu_tanh(x):
    # GELU tanh approximation (as in the torch GELU module used by the model)
    c = math.sqrt(2.0 / math.pi)
    return 0.5 * x * (1.0 + jnp.tanh(c * (x + 0.044715 * x * x * x)))


# ------------------------------ Pallas kernels -------------------------------
def transformer_block_kernel(x_ref, wqkv_ref, wo_ref, bo_ref,
                             g1_ref, b1_ref, g2_ref, b2_ref,
                             w1_ref, bf1_ref, w2_ref, bf2_ref,
                             o_ref, qkv_s, *, n_heads):
    x = x_ref[0].astype(jnp.float32)                       # (S, E) f32 residual
    S, E = x.shape
    Dh = E // n_heads

    # ---- attention: pre-LN -> fused QKV matmul -> per-head softmax -> proj --
    h = _layernorm(x, g1_ref[...], b1_ref[...]).astype(jnp.bfloat16)
    # single (E, 3E) matmul; 1/sqrt(Dh) already folded into the Q columns
    qkv_s[...] = jnp.dot(h, wqkv_ref[...],
                         preferred_element_type=jnp.float32).astype(jnp.bfloat16)

    row = jax.lax.broadcasted_iota(jnp.int32, (S, S), 0)
    col = jax.lax.broadcasted_iota(jnp.int32, (S, S), 1)
    causal = col > row                                     # mask future positions
    neg = jnp.float32(-1e30)                               # finite (NaN-safe)

    ctx_heads = []
    for hh in range(n_heads):                              # static unroll
        q_h = qkv_s[:, hh * Dh:(hh + 1) * Dh]              # (S, Dh) bf16 reads
        k_h = qkv_s[:, E + hh * Dh:E + (hh + 1) * Dh]
        v_h = qkv_s[:, 2 * E + hh * Dh:2 * E + (hh + 1) * Dh]
        sc = jax.lax.dot_general(q_h, k_h, (((1,), (1,)), ((), ())),
                                 preferred_element_type=jnp.float32)
        sc = jnp.where(causal, neg, sc)
        sc = sc - jnp.max(sc, axis=-1, keepdims=True)
        e = jnp.exp(sc)
        a = e * pl.reciprocal(jnp.sum(e, axis=-1, keepdims=True), approx=True)
        ctx_heads.append(jnp.dot(a.astype(jnp.bfloat16), v_h,
                                 preferred_element_type=jnp.float32))
    # assemble full-width context in registers -> one lane-dense out-proj matmul
    ctx = jnp.concatenate(ctx_heads, axis=-1).astype(jnp.bfloat16)   # (S, E)
    attn = jnp.dot(ctx, wo_ref[...],
                   preferred_element_type=jnp.float32) + bo_ref[...]
    x = x + attn                                           # residual (dropout=id)

    # ---- MLP: pre-LN -> GELU FF -> residual ---------------------------------
    h2 = _layernorm(x, g2_ref[...], b2_ref[...]).astype(jnp.bfloat16)
    f = jnp.dot(h2, w1_ref[...], preferred_element_type=jnp.float32) + bf1_ref[...]
    f = _gelu_tanh(f).astype(jnp.bfloat16)
    f = jnp.dot(f, w2_ref[...], preferred_element_type=jnp.float32) + bf2_ref[...]
    o_ref[0] = (x + f).astype(o_ref.dtype)                 # residual (dropout=id)


def final_ln_kernel(x_ref, g_ref, b_ref, o_ref):
    x = x_ref[...].astype(jnp.float32)                     # (tR, E)
    o_ref[...] = _layernorm(x, g_ref[...], b_ref[...]).astype(o_ref.dtype)


def head_kernel(h_ref, w_ref, o_ref):
    # pure matmul: LN already hoisted into its own kernel
    o_ref[...] = jnp.dot(h_ref[...], w_ref[...],
                         preferred_element_type=jnp.float32)


# ------------------------------- wrappers ------------------------------------
def _full_spec(a):
    nd = a.ndim
    return pl.BlockSpec(a.shape, lambda *_, nd=nd: (0,) * nd)


def _choose_row_tile(n, max_t=512):
    return min(max_t, ((n + 7) // 8) * 8)


def _pad_rows_to(x2d, tile):
    n = x2d.shape[0]
    n_pad = ((n + tile - 1) // tile) * tile
    if n_pad != n:
        x2d = jnp.pad(x2d, ((0, n_pad - n), (0, 0)))
    return x2d, n


def transformer_block(x, lp, n_heads):
    B, S, E = x.shape
    args = (x, lp['wqkv'], lp['wo'], lp['bo'], lp['g1'], lp['b1'],
            lp['g2'], lp['b2'], lp['w_ff1'], lp['b_ff1'], lp['w_ff2'], lp['b_ff2'])
    in_specs = [pl.BlockSpec((1, S, E), lambda b: (b, 0, 0))]
    in_specs += [_full_spec(a) for a in args[1:]]
    return pl.pallas_call(
        functools.partial(transformer_block_kernel, n_heads=n_heads),
        out_shape=jax.ShapeDtypeStruct((B, S, E), jnp.bfloat16),
        grid=(B,),
        in_specs=in_specs,
        out_specs=pl.BlockSpec((1, S, E), lambda b: (b, 0, 0)),
        scratch_shapes=[pltpu.VMEM((S, 3 * E), jnp.bfloat16)],
        compiler_params=pltpu.CompilerParams(dimension_semantics=("parallel",)),
    )(*args)


def final_ln(x2d, gamma, beta, tR):
    N, E = x2d.shape
    return pl.pallas_call(
        final_ln_kernel,
        out_shape=jax.ShapeDtypeStruct((N, E), jnp.bfloat16),
        grid=(N // tR,),
        in_specs=[pl.BlockSpec((tR, E), lambda r: (r, 0)),
                  _full_spec(gamma), _full_spec(beta)],
        out_specs=pl.BlockSpec((tR, E), lambda r: (r, 0)),
        compiler_params=pltpu.CompilerParams(dimension_semantics=("parallel",)),
    )(x2d, gamma, beta)


def final_head(h2d, w_pad, vocab_size, tR):
    N, E = h2d.shape
    Vp = w_pad.shape[1]
    tV = 512 if Vp % 512 == 0 else (256 if Vp % 256 == 0 else 128)
    # vocab tile is the OUTER grid axis: the (E, tV) weight block index is
    # constant across the inner row-tile axis, so each weight block is DMA'd
    # exactly once instead of once per row tile.
    out = pl.pallas_call(
        head_kernel,
        out_shape=jax.ShapeDtypeStruct((N, Vp), jnp.float32),
        grid=(Vp // tV, N // tR),
        in_specs=[pl.BlockSpec((tR, E), lambda j, r: (r, 0)),
                  pl.BlockSpec((E, tV), lambda j, r: (0, j))],
        out_specs=pl.BlockSpec((tR, tV), lambda j, r: (r, j)),
        compiler_params=pltpu.CompilerParams(
            dimension_semantics=("parallel", "parallel")),
    )(h2d, w_pad)
    return out[:, :vocab_size]


def gpt_forward(in_idx, prep, cfg):
    B, S = in_idx.shape
    E = cfg['emb_dim']
    # glue: embedding gather + positional embedding add (not the hot path)
    x = jnp.take(prep['tok_emb'], in_idx, axis=0) + prep['pos_emb'][:S][None]
    x = x.astype(jnp.bfloat16)                             # drop_emb: identity
    for lp in prep['layers']:
        x = transformer_block(x, lp, n_heads=cfg['n_heads'])
    x2d = x.reshape(B * S, E)
    tR = _choose_row_tile(B * S)
    x2d, n = _pad_rows_to(x2d, tR)
    h2d = final_ln(x2d, prep['final_gamma'], prep['final_beta'], tR)
    logits = final_head(h2d, prep['w_out'], prep['vocab_size'], tR)
    return logits[:n].reshape(B, S, -1)


# --------------------------- parameter initialization ------------------------
def init_params(cfg, key):
    E, V, C = cfg['emb_dim'], cfg['vocab_size'], cfg['context_length']
    L = cfg['n_layers']
    keys = jax.random.split(key, 3 + L)

    def nrm(k, shape, dtype=jnp.bfloat16):
        return (0.02 * jax.random.normal(k, shape)).astype(dtype)

    params = {
        'tok_emb': nrm(keys[0], (V, E), jnp.float32),
        'pos_emb': nrm(keys[1], (C, E), jnp.float32),
        'w_out': nrm(keys[2], (E, V)),                     # out_head, bias=False
        'final_gamma': jnp.ones((1, E), jnp.float32),
        'final_beta': jnp.zeros((1, E), jnp.float32),
        'layers': [],
    }
    for i in range(L):
        lk = jax.random.split(keys[3 + i], 6)
        params['layers'].append({
            'wq': nrm(lk[0], (E, E)),
            'wk': nrm(lk[1], (E, E)),
            'wv': nrm(lk[2], (E, E)),
            'wo': nrm(lk[3], (E, E)),
            'bo': jnp.zeros((1, E), jnp.float32),          # out_proj bias
            # qkv_bias=False (default GPT cfg) -> no q/k/v biases
            'g1': jnp.ones((1, E), jnp.float32),
            'b1': jnp.zeros((1, E), jnp.float32),
            'g2': jnp.ones((1, E), jnp.float32),
            'b2': jnp.zeros((1, E), jnp.float32),
            'w_ff1': nrm(lk[4], (E, 4 * E)),
            'b_ff1': jnp.zeros((1, 4 * E), jnp.float32),
            'w_ff2': nrm(lk[5], (4 * E, E)),
            'b_ff2': jnp.zeros((1, E), jnp.float32),
        })
    return params


def prepare_params(params, cfg):
    """One-time kernel-side param prep: fuse QKV (with 1/sqrt(Dh) folded into
    the Q columns) and lane-pad the vocab head weight."""
    E, H = cfg['emb_dim'], cfg['n_heads']
    Dh = E // H
    scale = 1.0 / math.sqrt(Dh)
    V = params['w_out'].shape[1]
    Vp = ((V + 127) // 128) * 128
    w_out = params['w_out']
    if Vp != V:
        w_out = jnp.pad(w_out, ((0, 0), (0, Vp - V)))
    prep = {
        'tok_emb': params['tok_emb'],
        'pos_emb': params['pos_emb'],
        'final_gamma': params['final_gamma'],
        'final_beta': params['final_beta'],
        'w_out': w_out,
        'vocab_size': V,
        'layers': [],
    }
    for p in params['layers']:
        wq_scaled = (p['wq'].astype(jnp.float32) * scale).astype(jnp.bfloat16)
        wqkv = jnp.concatenate([wq_scaled, p['wk'], p['wv']], axis=1)  # (E, 3E)
        prep['layers'].append({
            'wqkv': wqkv, 'wo': p['wo'], 'bo': p['bo'],
            'g1': p['g1'], 'b1': p['b1'], 'g2': p['g2'], 'b2': p['b2'],
            'w_ff1': p['w_ff1'], 'b_ff1': p['b_ff1'],
            'w_ff2': p['w_ff2'], 'b_ff2': p['b_ff2'],
        })
    return prep


# ------------------------------ pure-JAX reference ---------------------------
def reference_forward(in_idx, params, cfg):
    E, H = cfg['emb_dim'], cfg['n_heads']
    Dh = E // H
    B, S = in_idx.shape
    f32 = jnp.float32
    x = jnp.take(params['tok_emb'], in_idx, axis=0) + params['pos_emb'][:S][None]
    causal = jnp.triu(jnp.ones((S, S), bool), k=1)
    for p in params['layers']:
        h = _layernorm(x, p['g1'], p['b1'])
        q = h @ p['wq'].astype(f32)
        k = h @ p['wk'].astype(f32)
        v = h @ p['wv'].astype(f32)
        qh = q.reshape(B, S, H, Dh).transpose(0, 2, 1, 3)
        kh = k.reshape(B, S, H, Dh).transpose(0, 2, 1, 3)
        vh = v.reshape(B, S, H, Dh).transpose(0, 2, 1, 3)
        sc = jnp.einsum('bhqd,bhkd->bhqk', qh, kh) / math.sqrt(Dh)
        sc = jnp.where(causal, -jnp.inf, sc)
        a = jax.nn.softmax(sc, axis=-1)
        ctx = jnp.einsum('bhqk,bhkd->bhqd', a, vh)
        ctx = ctx.transpose(0, 2, 1, 3).reshape(B, S, E)
        x = x + ctx @ p['wo'].astype(f32) + p['bo']
        h2 = _layernorm(x, p['g2'], p['b2'])
        f = _gelu_tanh(h2 @ p['w_ff1'].astype(f32) + p['b_ff1'])
        x = x + f @ p['w_ff2'].astype(f32) + p['b_ff2']
    x = _layernorm(x, params['final_gamma'], params['final_beta'])
    return x @ params['w_out'].astype(f32)


# ----------------------------------- main ------------------------------------
if __name__ == "__main__":
    cfg = dict(vocab_size=256, context_length=16, emb_dim=128,
               n_heads=4, n_layers=2, drop_rate=0.1, qkv_bias=False)
    key = jax.random.PRNGKey(0)
    pkey, ikey = jax.random.split(key)
    params = init_params(cfg, pkey)
    prep = prepare_params(params, cfg)

    B, S = 2, 8
    in_idx = jax.random.randint(ikey, (B, S), 0, cfg['vocab_size'],
                                dtype=jnp.int32)

    run = jax.jit(lambda idx: gpt_forward(idx, prep, cfg))
    logits = jax.block_until_ready(run(in_idx))
    assert logits.shape == (B, S, cfg['vocab_size'])

    ref = reference_forward(in_idx, params, cfg)
    np.testing.assert_allclose(np.asarray(logits), np.asarray(ref),
                               rtol=2e-2, atol=2e-2)
    print("KERNEL_OK")
</pallas_src>

<mosaic_0001>
module attributes {stable_mosaic.version = 11 : i64} {
  func.func @final_ln_kernel(%arg0: i32, %arg1: memref<16x128xbf16, #tpu.memory_space<vmem>>, %arg2: memref<1x128xf32, #tpu.memory_space<vmem>>, %arg3: memref<1x128xf32, #tpu.memory_space<vmem>>, %arg4: memref<16x128xbf16, #tpu.memory_space<vmem>>) attributes {dimension_semantics = [#tpu.dimension_semantics<parallel>], iteration_bounds = array<i64: 1>, scalar_prefetch = 0 : i64, scratch_operands = 0 : i64, tpu.core_type = #tpu.core_type<tc>, window_params = [{transform_indices = @transform_0, window_bounds = array<i64: 16, 128>}, {pipeline_mode = #tpu.pipeline_mode<synchronous>, transform_indices = @transform_1, window_bounds = array<i64: 1, 128>}, {pipeline_mode = #tpu.pipeline_mode<synchronous>, transform_indices = @transform_2, window_bounds = array<i64: 1, 128>}, {transform_indices = @transform_3, window_bounds = array<i64: 16, 128>}]} {
    %c0 = arith.constant 0 : index
    %c0_0 = arith.constant 0 : index
    %0 = vector.load %arg1[%c0, %c0_0] : memref<16x128xbf16, #tpu.memory_space<vmem>>, vector<16x128xbf16>
    %1 = arith.extf %0 : vector<16x128xbf16> to vector<16x128xf32>
    %c0_1 = arith.constant 0 : index
    %c0_2 = arith.constant 0 : index
    %2 = vector.load %arg2[%c0_1, %c0_2] : memref<1x128xf32, #tpu.memory_space<vmem>>, vector<1x128xf32>
    %c0_3 = arith.constant 0 : index
    %c0_4 = arith.constant 0 : index
    %3 = vector.load %arg3[%c0_3, %c0_4] : memref<1x128xf32, #tpu.memory_space<vmem>>, vector<1x128xf32>
    %cst = arith.constant dense<0.000000e+00> : vector<16xf32>
    %4 = vector.multi_reduction <add>, %1, %cst [1] : vector<16x128xf32> to vector<16xf32>
    %5 = vector.shape_cast %4 : vector<16xf32> to vector<16x1xf32>
    %cst_5 = arith.constant 1.280000e+02 : f32
    %6 = vector.broadcast %cst_5 : f32 to vector<16x1xf32>
    %7 = arith.divf %5, %6 : vector<16x1xf32>
    %8 = vector.broadcast %7 : vector<16x1xf32> to vector<16x128xf32>
    %9 = arith.subf %1, %8 : vector<16x128xf32>
    %10 = arith.mulf %9, %9 : vector<16x128xf32>
    %cst_6 = arith.constant dense<0.000000e+00> : vector<16xf32>
    %11 = vector.multi_reduction <add>, %10, %cst_6 [1] : vector<16x128xf32> to vector<16xf32>
    %12 = vector.shape_cast %11 : vector<16xf32> to vector<16x1xf32>
    %cst_7 = arith.constant 1.280000e+02 : f32
    %13 = vector.broadcast %cst_7 : f32 to vector<16x1xf32>
    %14 = arith.divf %12, %13 : vector<16x1xf32>
    %cst_8 = arith.constant 9.99999974E-6 : f32
    %15 = vector.broadcast %cst_8 : f32 to vector<16x1xf32>
    %16 = arith.addf %14, %15 : vector<16x1xf32>
    %17 = math.rsqrt %16 : vector<16x1xf32>
    %18 = vector.broadcast %17 : vector<16x1xf32> to vector<16x128xf32>
    %19 = arith.mulf %9, %18 : vector<16x128xf32>
    %20 = vector.broadcast %2 : vector<1x128xf32> to vector<16x128xf32>
    %21 = arith.mulf %20, %19 : vector<16x128xf32>
    %22 = vector.broadcast %3 : vector<1x128xf32> to vector<16x128xf32>
    %23 = arith.addf %21, %22 : vector<16x128xf32>
    %24 = arith.truncf %23 : vector<16x128xf32> to vector<16x128xbf16>
    %c0_9 = arith.constant 0 : index
    %c0_10 = arith.constant 0 : index
    %25 = vector.load %arg4[%c0_9, %c0_10] : memref<16x128xbf16, #tpu.memory_space<vmem>>, vector<16x128xbf16>
    tpu.vector_store %arg4[%c0_9, %c0_10], %24 {strides = array<i32>} : memref<16x128xbf16, #tpu.memory_space<vmem>>, vector<16x128xbf16>,
    return
  }
  func.func @transform_0(%arg0: i32) -> (i32, i32) {
    %c0_i32 = arith.constant 0 : i32
    %c0_i32_0 = arith.constant 0 : i32
    return %arg0, %c0_i32 : i32, i32
  }
  func.func @transform_1(%arg0: i32) -> (i32, i32) {
    %c0_i32 = arith.constant 0 : i32
    %c0_i32_0 = arith.constant 0 : i32
    %c0_i32_1 = arith.constant 0 : i32
    return %c0_i32, %c0_i32_0 : i32, i32
  }
  func.func @transform_2(%arg0: i32) -> (i32, i32) {
    %c0_i32 = arith.constant 0 : i32
    %c0_i32_0 = arith.constant 0 : i32
    %c0_i32_1 = arith.constant 0 : i32
    return %c0_i32, %c0_i32_0 : i32, i32
  }
  func.func @transform_3(%arg0: i32) -> (i32, i32) {
    %c0_i32 = arith.constant 0 : i32
    %c0_i32_0 = arith.constant 0 : i32
    return %arg0, %c0_i32 : i32, i32
  }
}

module attributes {stable_mosaic.version = 11 : i64} {
  func.func @head_kernel(%arg0: i32, %arg1: i32, %arg2: memref<16x128xbf16, #tpu.memory_space<vmem>>, %arg3: memref<128x256xbf16, #tpu.memory_space<vmem>>, %arg4: memref<16x256xf32, #tpu.memory_space<vmem>>) attributes {dimension_semantics = [#tpu.dimension_semantics<parallel>, #tpu.dimension_semantics<parallel>], iteration_bounds = array<i64: 1, 1>, scalar_prefetch = 0 : i64, scratch_operands = 0 : i64, tpu.core_type = #tpu.core_type<tc>, window_params = [{transform_indices = @transform_0, window_bounds = array<i64: 16, 128>}, {transform_indices = @transform_1, window_bounds = array<i64: 128, 256>}, {transform_indices = @transform_2, window_bounds = array<i64: 16, 256>}]} {
    %c0 = arith.constant 0 : index
    %c0_0 = arith.constant 0 : index
    %0 = vector.load %arg2[%c0, %c0_0] : memref<16x128xbf16, #tpu.memory_space<vmem>>, vector<16x128xbf16>
    %c0_1 = arith.constant 0 : index
    %c0_2 = arith.constant 0 : index
    %1 = vector.load %arg3[%c0_1, %c0_2] : memref<128x256xbf16, #tpu.memory_space<vmem>>, vector<128x256xbf16>
    %cst = arith.constant dense<0.000000e+00> : vector<16x256xf32>
    %2 = tpu.matmul %0, %1, %cst {dimension_numbers = #tpu.dot_dimension_numbers<[1], [0], [0], [1], [0, 0, 1, 1], [], []>} : vector<16x128xbf16>, vector<128x256xbf16>, vector<16x256xf32> -> vector<16x256xf32>
    %c0_3 = arith.constant 0 : index
    %c0_4 = arith.constant 0 : index
    %3 = vector.load %arg4[%c0_3, %c0_4] : memref<16x256xf32, #tpu.memory_space<vmem>>, vector<16x256xf32>
    tpu.vector_store %arg4[%c0_3, %c0_4], %2 {strides = array<i32>} : memref<16x256xf32, #tpu.memory_space<vmem>>, vector<16x256xf32>,
    return
  }
  func.func @transform_0(%arg0: i32, %arg1: i32) -> (i32, i32) {
    %c0_i32 = arith.constant 0 : i32
    %c0_i32_0 = arith.constant 0 : i32
    return %arg1, %c0_i32 : i32, i32
  }
  func.func @transform_1(%arg0: i32, %arg1: i32) -> (i32, i32) {
    %c0_i32 = arith.constant 0 : i32
    %c0_i32_0 = arith.constant 0 : i32
    return %c0_i32, %arg0 : i32, i32
  }
  func.func @transform_2(%arg0: i32, %arg1: i32) -> (i32, i32) {
    %c0_i32 = arith.constant 0 : i32
    return %arg1, %arg0 : i32, i32
  }
}

module attributes {stable_mosaic.version = 11 : i64} {
  func.func @transformer_block_kernel(%arg0: i32, %arg1: memref<1x8x128xbf16, #tpu.memory_space<vmem>>, %arg2: memref<128x384xbf16, #tpu.memory_space<vmem>>, %arg3: memref<128x128xbf16, #tpu.memory_space<vmem>>, %arg4: memref<1x128xf32, #tpu.memory_space<vmem>>, %arg5: memref<1x128xf32, #tpu.memory_space<vmem>>, %arg6: memref<1x128xf32, #tpu.memory_space<vmem>>, %arg7: memref<1x128xf32, #tpu.memory_space<vmem>>, %arg8: memref<1x128xf32, #tpu.memory_space<vmem>>, %arg9: memref<128x512xbf16, #tpu.memory_space<vmem>>, %arg10: memref<1x512xf32, #tpu.memory_space<vmem>>, %arg11: memref<512x128xbf16, #tpu.memory_space<vmem>>, %arg12: memref<1x128xf32, #tpu.memory_space<vmem>>, %arg13: memref<1x8x128xbf16, #tpu.memory_space<vmem>>, %arg14: memref<8x384xbf16, #tpu.memory_space<vmem>>) attributes {dimension_semantics = [#tpu.dimension_semantics<parallel>], iteration_bounds = array<i64: 2>, scalar_prefetch = 0 : i64, scratch_operands = 1 : i64, tpu.core_type = #tpu.core_type<tc>, window_params = [{transform_indices = @transform_0, window_bounds = array<i64: 1, 8, 128>}, {pipeline_mode = #tpu.pipeline_mode<synchronous>, transform_indices = @transform_1, window_bounds = array<i64: 128, 384>}, {pipeline_mode = #tpu.pipeline_mode<synchronous>, transform_indices = @transform_2, window_bounds = array<i64: 128, 128>}, {pipeline_mode = #tpu.pipeline_mode<synchronous>, transform_indices = @transform_3, window_bounds = array<i64: 1, 128>}, {pipeline_mode = #tpu.pipeline_mode<synchronous>, transform_indices = @transform_4, window_bounds = array<i64: 1, 128>}, {pipeline_mode = #tpu.pipeline_mode<synchronous>, transform_indices = @transform_5, window_bounds = array<i64: 1, 128>}, {pipeline_mode = #tpu.pipeline_mode<synchronous>, transform_indices = @transform_6, window_bounds = array<i64: 1, 128>}, {pipeline_mode = #tpu.pipeline_mode<synchronous>, transform_indices = @transform_7, window_bounds = array<i64: 1, 128>}, {pipeline_mode = #tpu.pipeline_mode<synchronous>, transform_indices = @transform_8, window_bounds = array<i64: 128, 512>}, {pipeline_mode = #tpu.pipeline_mode<synchronous>, transform_indices = @transform_9, window_bounds = array<i64: 1, 512>}, {pipeline_mode = #tpu.pipeline_mode<synchronous>, transform_indices = @transform_10, window_bounds = array<i64: 512, 128>}, {pipeline_mode = #tpu.pipeline_mode<synchronous>, transform_indices = @transform_11, window_bounds = array<i64: 1, 128>}, {transform_indices = @transform_12, window_bounds = array<i64: 1, 8, 128>}]} {
    %c0 = arith.constant 0 : index
    %c0_0 = arith.constant 0 : index
    %c0_1 = arith.constant 0 : index
    %0 = vector.load %arg1[%c0, %c0_0, %c0_1] : memref<1x8x128xbf16, #tpu.memory_space<vmem>>, vector<1x8x128xbf16>
    %1 = vector.shape_cast %0 : vector<1x8x128xbf16> to vector<8x128xbf16>
    %2 = arith.extf %1 : vector<8x128xbf16> to vector<8x128xf32>
    %c0_2 = arith.constant 0 : index
    %c0_3 = arith.constant 0 : index
    %3 = vector.load %arg5[%c0_2, %c0_3] : memref<1x128xf32, #tpu.memory_space<vmem>>, vector<1x128xf32>
    %c0_4 = arith.constant 0 : index
    %c0_5 = arith.constant 0 : index
    %4 = vector.load %arg6[%c0_4, %c0_5] : memref<1x128xf32, #tpu.memory_space<vmem>>, vector<1x128xf32>
    %cst = arith.constant dense<0.000000e+00> : vector<8xf32>
    %5 = vector.multi_reduction <add>, %2, %cst [1] : vector<8x128xf32> to vector<8xf32>
    %6 = vector.shape_cast %5 : vector<8xf32> to vector<8x1xf32>
    %cst_6 = arith.constant 1.280000e+02 : f32
    %7 = vector.broadcast %cst_6 : f32 to vector<8x1xf32>
    %8 = arith.divf %6, %7 : vector<8x1xf32>
    %9 = vector.broadcast %8 : vector<8x1xf32> to vector<8x128xf32>
    %10 = arith.subf %2, %9 : vector<8x128xf32>
    %11 = arith.mulf %10, %10 : vector<8x128xf32>
    %cst_7 = arith.constant dense<0.000000e+00> : vector<8xf32>
    %12 = vector.multi_reduction <add>, %11, %cst_7 [1] : vector<8x128xf32> to vector<8xf32>
    %13 = vector.shape_cast %12 : vector<8xf32> to vector<8x1xf32>
    %cst_8 = arith.constant 1.280000e+02 : f32
    %14 = vector.broadcast %cst_8 : f32 to vector<8x1xf32>
    %15 = arith.divf %13, %14 : vector<8x1xf32>
    %cst_9 = arith.constant 9.99999974E-6 : f32
    %16 = vector.broadcast %cst_9 : f32 to vector<8x1xf32>
    %17 = arith.addf %15, %16 : vector<8x1xf32>
    %18 = math.rsqrt %17 : vector<8x1xf32>
    %19 = vector.broadcast %18 : vector<8x1xf32> to vector<8x128xf32>
    %20 = arith.mulf %10, %19 : vector<8x128xf32>
    %21 = vector.broadcast %3 : vector<1x128xf32> to vector<8x128xf32>
    %22 = arith.mulf %21, %20 : vector<8x128xf32>
    %23 = vector.broadcast %4 : vector<1x128xf32> to vector<8x128xf32>
    %24 = arith.addf %22, %23 : vector<8x128xf32>
    %25 = arith.truncf %24 : vector<8x128xf32> to vector<8x128xbf16>
    %c0_10 = arith.constant 0 : index
    %c0_11 = arith.constant 0 : index
    %26 = vector.load %arg2[%c0_10, %c0_11] : memref<128x384xbf16, #tpu.memory_space<vmem>>, vector<128x384xbf16>
    %cst_12 = arith.constant dense<0.000000e+00> : vector<8x384xf32>
    %27 = tpu.matmul %25, %26, %cst_12 {dimension_numbers = #tpu.dot_dimension_numbers<[1], [0], [0], [1], [0, 0, 1, 1], [], []>} : vector<8x128xbf16>, vector<128x384xbf16>, vector<8x384xf32> -> vector<8x384xf32>
    %28 = arith.truncf %27 : vector<8x384xf32> to vector<8x384xbf16>
    %c0_13 = arith.constant 0 : index
    %c0_14 = arith.constant 0 : index
    %29 = vector.load %arg14[%c0_13, %c0_14] : memref<8x384xbf16, #tpu.memory_space<vmem>>, vector<8x384xbf16>
    tpu.vector_store %arg14[%c0_13, %c0_14], %28 {strides = array<i32>} : memref<8x384xbf16, #tpu.memory_space<vmem>>, vector<8x384xbf16>,
    %30 = tpu.iota {dimensions = array<i32: 0>} : vector<8x8xi32>
    %31 = tpu.iota {dimensions = array<i32: 1>} : vector<8x8xi32>
    %32 = arith.cmpi sgt, %31, %30 : vector<8x8xi32>
    %c0_15 = arith.constant 0 : index
    %c0_16 = arith.constant 0 : index
    %33 = vector.load %arg14[%c0_15, %c0_16] : memref<8x384xbf16, #tpu.memory_space<vmem>>, vector<8x32xbf16>
    %c0_17 = arith.constant 0 : index
    %c128 = arith.constant 128 : index
    %34 = vector.load %arg14[%c0_17, %c128] : memref<8x384xbf16, #tpu.memory_space<vmem>>, vector<8x32xbf16>
    %c0_18 = arith.constant 0 : index
    %c256 = arith.constant 256 : index
    %35 = vector.load %arg14[%c0_18, %c256] : memref<8x384xbf16, #tpu.memory_space<vmem>>, vector<8x32xbf16>
    %cst_19 = arith.constant dense<0.000000e+00> : vector<8x8xf32>
    %36 = tpu.matmul %33, %34, %cst_19 {dimension_numbers = #tpu.dot_dimension_numbers<[1], [1], [0], [0], [0, 0, 1, 0], [], []>} : vector<8x32xbf16>, vector<8x32xbf16>, vector<8x8xf32> -> vector<8x8xf32>
    %cst_20 = arith.constant -1.000000e+30 : f32
    %37 = vector.broadcast %cst_20 : f32 to vector<8x8xf32>
    %38 = arith.select %32, %37, %36 : vector<8x8xi1>, vector<8x8xf32>
    %cst_21 = arith.constant dense<0xFF800000> : vector<8xf32>
    %39 = vector.multi_reduction <maximumf>, %38, %cst_21 [1] : vector<8x8xf32> to vector<8xf32>
    %40 = vector.shape_cast %39 : vector<8xf32> to vector<8x1xf32>
    %41 = vector.broadcast %40 : vector<8x1xf32> to vector<8x8xf32>
    %42 = arith.subf %38, %41 : vector<8x8xf32>
    %43 = math.exp %42 : vector<8x8xf32>
    %cst_22 = arith.constant dense<0.000000e+00> : vector<8xf32>
    %44 = vector.multi_reduction <add>, %43, %cst_22 [1] : vector<8x8xf32> to vector<8xf32>
    %45 = vector.shape_cast %44 : vector<8xf32> to vector<8x1xf32>
    %46 = tpu.reciprocal %45 {approx = true} : vector<8x1xf32> -> vector<8x1xf32>
    %47 = vector.broadcast %46 : vector<8x1xf32> to vector<8x8xf32>
    %48 = arith.mulf %43, %47 : vector<8x8xf32>
    %49 = arith.truncf %48 : vector<8x8xf32> to vector<8x8xbf16>
    %cst_23 = arith.constant dense<0.000000e+00> : vector<8x32xf32>
    %50 = tpu.matmul %49, %35, %cst_23 {dimension_numbers = #tpu.dot_dimension_numbers<[1], [0], [0], [1], [0, 0, 1, 1], [], []>} : vector<8x8xbf16>, vector<8x32xbf16>, vector<8x32xf32> -> vector<8x32xf32>
    %c0_24 = arith.constant 0 : index
    %c32 = arith.constant 32 : index
    %51 = vector.load %arg14[%c0_24, %c32] : memref<8x384xbf16, #tpu.memory_space<vmem>>, vector<8x32xbf16>
    %c0_25 = arith.constant 0 : index
    %c160 = arith.constant 160 : index
    %52 = vector.load %arg14[%c0_25, %c160] : memref<8x384xbf16, #tpu.memory_space<vmem>>, vector<8x32xbf16>
    %c0_26 = arith.constant 0 : index
    %c288 = arith.constant 288 : index
    %53 = vector.load %arg14[%c0_26, %c288] : memref<8x384xbf16, #tpu.memory_space<vmem>>, vector<8x32xbf16>
    %cst_27 = arith.constant dense<0.000000e+00> : vector<8x8xf32>
    %54 = tpu.matmul %51, %52, %cst_27 {dimension_numbers = #tpu.dot_dimension_numbers<[1], [1], [0], [0], [0, 0, 1, 0], [], []>} : vector<8x32xbf16>, vector<8x32xbf16>, vector<8x8xf32> -> vector<8x8xf32>
    %cst_28 = arith.constant -1.000000e+30 : f32
    %55 = vector.broadcast %cst_28 : f32 to vector<8x8xf32>
    %56 = arith.select %32, %55, %54 : vector<8x8xi1>, vector<8x8xf32>
    %cst_29 = arith.constant dense<0xFF800000> : vector<8xf32>
    %57 = vector.multi_reduction <maximumf>, %56, %cst_29 [1] : vector<8x8xf32> to vector<8xf32>
    %58 = vector.shape_cast %57 : vector<8xf32> to vector<8x1xf32>
    %59 = vector.broadcast %58 : vector<8x1xf32> to vector<8x8xf32>
    %60 = arith.subf %56, %59 : vector<8x8xf32>
    %61 = math.exp %60 : vector<8x8xf32>
    %cst_30 = arith.constant dense<0.000000e+00> : vector<8xf32>
    %62 = vector.multi_reduction <add>, %61, %cst_30 [1] : vector<8x8xf32> to vector<8xf32>
    %63 = vector.shape_cast %62 : vector<8xf32> to vector<8x1xf32>
    %64 = tpu.reciprocal %63 {approx = true} : vector<8x1xf32> -> vector<8x1xf32>
    %65 = vector.broadcast %64 : vector<8x1xf32> to vector<8x8xf32>
    %66 = arith.mulf %61, %65 : vector<8x8xf32>
    %67 = arith.truncf %66 : vector<8x8xf32> to vector<8x8xbf16>
    %cst_31 = arith.constant dense<0.000000e+00> : vector<8x32xf32>
    %68 = tpu.matmul %67, %53, %cst_31 {dimension_numbers = #tpu.dot_dimension_numbers<[1], [0], [0], [1], [0, 0, 1, 1], [], []>} : vector<8x8xbf16>, vector<8x32xbf16>, vector<8x32xf32> -> vector<8x32xf32>
    %c0_32 = arith.constant 0 : index
    %c64 = arith.constant 64 : index
    %69 = vector.load %arg14[%c0_32, %c64] : memref<8x384xbf16, #tpu.memory_space<vmem>>, vector<8x32xbf16>
    %c0_33 = arith.constant 0 : index
    %c192 = arith.constant 192 : index
    %70 = vector.load %arg14[%c0_33, %c192] : memref<8x384xbf16, #tpu.memory_space<vmem>>, vector<8x32xbf16>
    %c0_34 = arith.constant 0 : index
    %c320 = arith.constant 320 : index
    %71 = vector.load %arg14[%c0_34, %c320] : memref<8x384xbf16, #tpu.memory_space<vmem>>, vector<8x32xbf16>
    %cst_35 = arith.constant dense<0.000000e+00> : vector<8x8xf32>
    %72 = tpu.matmul %69, %70, %cst_35 {dimension_numbers = #tpu.dot_dimension_numbers<[1], [1], [0], [0], [0, 0, 1, 0], [], []>} : vector<8x32xbf16>, vector<8x32xbf16>, vector<8x8xf32> -> vector<8x8xf32>
    %cst_36 = arith.constant -1.000000e+30 : f32
    %73 = vector.broadcast %cst_36 : f32 to vector<8x8xf32>
    %74 = arith.select %32, %73, %72 : vector<8x8xi1>, vector<8x8xf32>
    %cst_37 = arith.constant dense<0xFF800000> : vector<8xf32>
    %75 = vector.multi_reduction <maximumf>, %74, %cst_37 [1] : vector<8x8xf32> to vector<8xf32>
    %76 = vector.shape_cast %75 : vector<8xf32> to vector<8x1xf32>
    %77 = vector.broadcast %76 : vector<8x1xf32> to vector<8x8xf32>
    %78 = arith.subf %74, %77 : vector<8x8xf32>
    %79 = math.exp %78 : vector<8x8xf32>
    %cst_38 = arith.constant dense<0.000000e+00> : vector<8xf32>
    %80 = vector.multi_reduction <add>, %79, %cst_38 [1] : vector<8x8xf32> to vector<8xf32>
    %81 = vector.shape_cast %80 : vector<8xf32> to vector<8x1xf32>
    %82 = tpu.reciprocal %81 {approx = true} : vector<8x1xf32> -> vector<8x1xf32>
    %83 = vector.broadcast %82 : vector<8x1xf32> to vector<8x8xf32>
    %84 = arith.mulf %79, %83 : vector<8x8xf32>
    %85 = arith.truncf %84 : vector<8x8xf32> to vector<8x8xbf16>
    %cst_39 = arith.constant dense<0.000000e+00> : vector<8x32xf32>
    %86 = tpu.matmul %85, %71, %cst_39 {dimension_numbers = #tpu.dot_dimension_numbers<[1], [0], [0], [1], [0, 0, 1, 1], [], []>} : vector<8x8xbf16>, vector<8x32xbf16>, vector<8x32xf32> -> vector<8x32xf32>
    %c0_40 = arith.constant 0 : index
    %c96 = arith.constant 96 : index
    %87 = vector.load %arg14[%c0_40, %c96] : memref<8x384xbf16, #tpu.memory_space<vmem>>, vector<8x32xbf16>
    %c0_41 = arith.constant 0 : index
    %c224 = arith.constant 224 : index
    %88 = vector.load %arg14[%c0_41, %c224] : memref<8x384xbf16, #tpu.memory_space<vmem>>, vector<8x32xbf16>
    %c0_42 = arith.constant 0 : index
    %c352 = arith.constant 352 : index
    %89 = vector.load %arg14[%c0_42, %c352] : memref<8x384xbf16, #tpu.memory_space<vmem>>, vector<8x32xbf16>
    %cst_43 = arith.constant dense<0.000000e+00> : vector<8x8xf32>
    %90 = tpu.matmul %87, %88, %cst_43 {dimension_numbers = #tpu.dot_dimension_numbers<[1], [1], [0], [0], [0, 0, 1, 0], [], []>} : vector<8x32xbf16>, vector<8x32xbf16>, vector<8x8xf32> -> vector<8x8xf32>
    %cst_44 = arith.constant -1.000000e+30 : f32
    %91 = vector.broadcast %cst_44 : f32 to vector<8x8xf32>
    %92 = arith.select %32, %91, %90 : vector<8x8xi1>, vector<8x8xf32>
    %cst_45 = arith.constant dense<0xFF800000> : vector<8xf32>
    %93 = vector.multi_reduction <maximumf>, %92, %cst_45 [1] : vector<8x8xf32> to vector<8xf32>
    %94 = vector.shape_cast %93 : vector<8xf32> to vector<8x1xf32>
    %95 = vector.broadcast %94 : vector<8x1xf32> to vector<8x8xf32>
    %96 = arith.subf %92, %95 : vector<8x8xf32>
    %97 = math.exp %96 : vector<8x8xf32>
    %cst_46 = arith.constant dense<0.000000e+00> : vector<8xf32>
    %98 = vector.multi_reduction <add>, %97, %cst_46 [1] : vector<8x8xf32> to vector<8xf32>
    %99 = vector.shape_cast %98 : vector<8xf32> to vector<8x1xf32>
    %100 = tpu.reciprocal %99 {approx = true} : vector<8x1xf32> -> vector<8x1xf32>
    %101 = vector.broadcast %100 : vector<8x1xf32> to vector<8x8xf32>
    %102 = arith.mulf %97, %101 : vector<8x8xf32>
    %103 = arith.truncf %102 : vector<8x8xf32> to vector<8x8xbf16>
    %cst_47 = arith.constant dense<0.000000e+00> : vector<8x32xf32>
    %104 = tpu.matmul %103, %89, %cst_47 {dimension_numbers = #tpu.dot_dimension_numbers<[1], [0], [0], [1], [0, 0, 1, 1], [], []>} : vector<8x8xbf16>, vector<8x32xbf16>, vector<8x32xf32> -> vector<8x32xf32>
    %105 = tpu.concatenate %50, %68, %86, %104 in 1 : vector<8x32xf32>, vector<8x32xf32>, vector<8x32xf32>, vector<8x32xf32> -> vector<8x128xf32>
    %106 = arith.truncf %105 : vector<8x128xf32> to vector<8x128xbf16>
    %c0_48 = arith.constant 0 : index
    %c0_49 = arith.constant 0 : index
    %107 = vector.load %arg3[%c0_48, %c0_49] : memref<128x128xbf16, #tpu.memory_space<vmem>>, vector<128x128xbf16>
    %cst_50 = arith.constant dense<0.000000e+00> : vector<8x128xf32>
    %108 = tpu.matmul %106, %107, %cst_50 {dimension_numbers = #tpu.dot_dimension_numbers<[1], [0], [0], [1], [0, 0, 1, 1], [], []>} : vector<8x128xbf16>, vector<128x128xbf16>, vector<8x128xf32> -> vector<8x128xf32>
    %c0_51 = arith.constant 0 : index
    %c0_52 = arith.constant 0 : index
    %109 = vector.load %arg4[%c0_51, %c0_52] : memref<1x128xf32, #tpu.memory_space<vmem>>, vector<1x128xf32>
    %110 = vector.broadcast %109 : vector<1x128xf32> to vector<8x128xf32>
    %111 = arith.addf %108, %110 : vector<8x128xf32>
    %112 = arith.addf %2, %111 : vector<8x128xf32>
    %c0_53 = arith.constant 0 : index
    %c0_54 = arith.constant 0 : index
    %113 = vector.load %arg7[%c0_53, %c0_54] : memref<1x128xf32, #tpu.memory_space<vmem>>, vector<1x128xf32>
    %c0_55 = arith.constant 0 : index
    %c0_56 = arith.constant 0 : index
    %114 = vector.load %arg8[%c0_55, %c0_56] : memref<1x128xf32, #tpu.memory_space<vmem>>, vector<1x128xf32>
    %cst_57 = arith.constant dense<0.000000e+00> : vector<8xf32>
    %115 = vector.multi_reduction <add>, %112, %cst_57 [1] : vector<8x128xf32> to vector<8xf32>
    %116 = vector.shape_cast %115 : vector<8xf32> to vector<8x1xf32>
    %cst_58 = arith.constant 1.280000e+02 : f32
    %117 = vector.broadcast %cst_58 : f32 to vector<8x1xf32>
    %118 = arith.divf %116, %117 : vector<8x1xf32>
    %119 = vector.broadcast %118 : vector<8x1xf32> to vector<8x128xf32>
    %120 = arith.subf %112, %119 : vector<8x128xf32>
    %121 = arith.mulf %120, %120 : vector<8x128xf32>
    %cst_59 = arith.constant dense<0.000000e+00> : vector<8xf32>
    %122 = vector.multi_reduction <add>, %121, %cst_59 [1] : vector<8x128xf32> to vector<8xf32>
    %123 = vector.shape_cast %122 : vector<8xf32> to vector<8x1xf32>
    %cst_60 = arith.constant 1.280000e+02 : f32
    %124 = vector.broadcast %cst_60 : f32 to vector<8x1xf32>
    %125 = arith.divf %123, %124 : vector<8x1xf32>
    %cst_61 = arith.constant 9.99999974E-6 : f32
    %126 = vector.broadcast %cst_61 : f32 to vector<8x1xf32>
    %127 = arith.addf %125, %126 : vector<8x1xf32>
    %128 = math.rsqrt %127 : vector<8x1xf32>
    %129 = vector.broadcast %128 : vector<8x1xf32> to vector<8x128xf32>
    %130 = arith.mulf %120, %129 : vector<8x128xf32>
    %131 = vector.broadcast %113 : vector<1x128xf32> to vector<8x128xf32>
    %132 = arith.mulf %131, %130 : vector<8x128xf32>
    %133 = vector.broadcast %114 : vector<1x128xf32> to vector<8x128xf32>
    %134 = arith.addf %132, %133 : vector<8x128xf32>
    %135 = arith.truncf %134 : vector<8x128xf32> to vector<8x128xbf16>
    %c0_62 = arith.constant 0 : index
    %c0_63 = arith.constant 0 : index
    %136 = vector.load %arg9[%c0_62, %c0_63] : memref<128x512xbf16, #tpu.memory_space<vmem>>, vector<128x512xbf16>
    %cst_64 = arith.constant dense<0.000000e+00> : vector<8x512xf32>
    %137 = tpu.matmul %135, %136, %cst_64 {dimension_numbers = #tpu.dot_dimension_numbers<[1], [0], [0], [1], [0, 0, 1, 1], [], []>} : vector<8x128xbf16>, vector<128x512xbf16>, vector<8x512xf32> -> vector<8x512xf32>
    %c0_65 = arith.constant 0 : index
    %c0_66 = arith.constant 0 : index
    %138 = vector.load %arg10[%c0_65, %c0_66] : memref<1x512xf32, #tpu.memory_space<vmem>>, vector<1x512xf32>
    %139 = vector.broadcast %138 : vector<1x512xf32> to vector<8x512xf32>
    %140 = arith.addf %137, %139 : vector<8x512xf32>
    %cst_67 = arith.constant 5.000000e-01 : f32
    %141 = vector.broadcast %cst_67 : f32 to vector<8x512xf32>
    %142 = arith.mulf %141, %140 : vector<8x512xf32>
    %cst_68 = arith.constant 4.471500e-02 : f32
    %143 = vector.broadcast %cst_68 : f32 to vector<8x512xf32>
    %144 = arith.mulf %143, %140 : vector<8x512xf32>
    %145 = arith.mulf %144, %140 : vector<8x512xf32>
    %146 = arith.mulf %145, %140 : vector<8x512xf32>
    %147 = arith.addf %140, %146 : vector<8x512xf32>
    %cst_69 = arith.constant 0.797884583 : f32
    %148 = vector.broadcast %cst_69 : f32 to vector<8x512xf32>
    %149 = arith.mulf %148, %147 : vector<8x512xf32>
    %150 = math.tanh %149 : vector<8x512xf32>
    %cst_70 = arith.constant 1.000000e+00 : f32
    %151 = vector.broadcast %cst_70 : f32 to vector<8x512xf32>
    %152 = arith.addf %151, %150 : vector<8x512xf32>
    %153 = arith.mulf %142, %152 : vector<8x512xf32>
    %154 = arith.truncf %153 : vector<8x512xf32> to vector<8x512xbf16>
    %c0_71 = arith.constant 0 : index
    %c0_72 = arith.constant 0 : index
    %155 = vector.load %arg11[%c0_71, %c0_72] : memref<512x128xbf16, #tpu.memory_space<vmem>>, vector<512x128xbf16>
    %cst_73 = arith.constant dense<0.000000e+00> : vector<8x128xf32>
    %156 = tpu.matmul %154, %155, %cst_73 {dimension_numbers = #tpu.dot_dimension_numbers<[1], [0], [0], [1], [0, 0, 1, 1], [], []>} : vector<8x512xbf16>, vector<512x128xbf16>, vector<8x128xf32> -> vector<8x128xf32>
    %c0_74 = arith.constant 0 : index
    %c0_75 = arith.constant 0 : index
    %157 = vector.load %arg12[%c0_74, %c0_75] : memref<1x128xf32, #tpu.memory_space<vmem>>, vector<1x128xf32>
    %158 = vector.broadcast %157 : vector<1x128xf32> to vector<8x128xf32>
    %159 = arith.addf %156, %158 : vector<8x128xf32>
    %160 = arith.addf %112, %159 : vector<8x128xf32>
    %161 = arith.truncf %160 : vector<8x128xf32> to vector<8x128xbf16>
    %c0_76 = arith.constant 0 : index
    %c0_77 = arith.constant 0 : index
    %c0_78 = arith.constant 0 : index
    %162 = vector.load %arg13[%c0_76, %c0_77, %c0_78] : memref<1x8x128xbf16, #tpu.memory_space<vmem>>, vector<1x8x128xbf16>
    %163 = vector.shape_cast %162 : vector<1x8x128xbf16> to vector<8x128xbf16>
    %164 = vector.shape_cast %161 : vector<8x128xbf16> to vector<1x8x128xbf16>
    tpu.vector_store %arg13[%c0_76, %c0_77, %c0_78], %164 {strides = array<i32>} : memref<1x8x128xbf16, #tpu.memory_space<vmem>>, vector<1x8x128xbf16>,
    return
  }
  func.func @transform_0(%arg0: i32) -> (i32, i32, i32) {
    %c0_i32 = arith.constant 0 : i32
    %c0_i32_0 = arith.constant 0 : i32
    %c0_i32_1 = arith.constant 0 : i32
    return %arg0, %c0_i32, %c0_i32_0 : i32, i32, i32
  }
  func.func @transform_1(%arg0: i32) -> (i32, i32) {
    %c0_i32 = arith.constant 0 : i32
    %c0_i32_0 = arith.constant 0 : i32
    %c0_i32_1 = arith.constant 0 : i32
    return %c0_i32, %c0_i32_0 : i32, i32
  }
  func.func @transform_2(%arg0: i32) -> (i32, i32) {
    %c0_i32 = arith.constant 0 : i32
    %c0_i32_0 = arith.constant 0 : i32
    %c0_i32_1 = arith.constant 0 : i32
    return %c0_i32, %c0_i32_0 : i32, i32
  }
  func.func @transform_3(%arg0: i32) -> (i32, i32) {
    %c0_i32 = arith.constant 0 : i32
    %c0_i32_0 = arith.constant 0 : i32
    %c0_i32_1 = arith.constant 0 : i32
    return %c0_i32, %c0_i32_0 : i32, i32
  }
  func.func @transform_4(%arg0: i32) -> (i32, i32) {
    %c0_i32 = arith.constant 0 : i32
    %c0_i32_0 = arith.constant 0 : i32
    %c0_i32_1 = arith.constant 0 : i32
    return %c0_i32, %c0_i32_0 : i32, i32
  }
  func.func @transform_5(%arg0: i32) -> (i32, i32) {
    %c0_i32 = arith.constant 0 : i32
    %c0_i32_0 = arith.constant 0 : i32
    %c0_i32_1 = arith.constant 0 : i32
    return %c0_i32, %c0_i32_0 : i32, i32
  }
  func.func @transform_6(%arg0: i32) -> (i32, i32) {
    %c0_i32 = arith.constant 0 : i32
    %c0_i32_0 = arith.constant 0 : i32
    %c0_i32_1 = arith.constant 0 : i32
    return %c0_i32, %c0_i32_0 : i32, i32
  }
  func.func @transform_7(%arg0: i32) -> (i32, i32) {
    %c0_i32 = arith.constant 0 : i32
    %c0_i32_0 = arith.constant 0 : i32
    %c0_i32_1 = arith.constant 0 : i32
    return %c0_i32, %c0_i32_0 : i32, i32
  }
  func.func @transform_8(%arg0: i32) -> (i32, i32) {
    %c0_i32 = arith.constant 0 : i32
    %c0_i32_0 = arith.constant 0 : i32
    %c0_i32_1 = arith.constant 0 : i32
    return %c0_i32, %c0_i32_0 : i32, i32
  }
  func.func @transform_9(%arg0: i32) -> (i32, i32) {
    %c0_i32 = arith.constant 0 : i32
    %c0_i32_0 = arith.constant 0 : i32
    %c0_i32_1 = arith.constant 0 : i32
    return %c0_i32, %c0_i32_0 : i32, i32
  }
  func.func @transform_10(%arg0: i32) -> (i32, i32) {
    %c0_i32 = arith.constant 0 : i32
    %c0_i32_0 = arith.constant 0 : i32
    %c0_i32_1 = arith.constant 0 : i32
    return %c0_i32, %c0_i32_0 : i32, i32
  }
  func.func @transform_11(%arg0: i32) -> (i32, i32) {
    %c0_i32 = arith.constant 0 : i32
    %c0_i32_0 = arith.constant 0 : i32
    %c0_i32_1 = arith.constant 0 : i32
    return %c0_i32, %c0_i32_0 : i32, i32
  }
  func.func @transform_12(%arg0: i32) -> (i32, i32, i32) {
    %c0_i32 = arith.constant 0 : i32
    %c0_i32_0 = arith.constant 0 : i32
    %c0_i32_1 = arith.constant 0 : i32
    return %arg0, %c0_i32, %c0_i32_0 : i32, i32, i32
  }
}

</mosaic_0001>

<llo_original>
// kernel: _lambda_.7
$region0: #{_lambda_.7}
  #allocation0 [shape = 'u32[]', space=smem, size = 0x4, offset = 0x4, fixed_abs, tag = 'smem constant byte address 0x4 - core index']
  #allocation1 [shape = 'u32[144,128]{1,0:T(1,128)}', space=vmem, size = 0x12000, scoped, tag = 'internal scratch']
  %s0 = inlined_call_operand.vmem [shape: bf16[16,128], index: 0, kind: input, shape index: {}]
  %s1 = inlined_call_operand.vmem [shape: bf16[128,256], index: 1, kind: input, shape index: {}]
  %s2 = inlined_call_operand.hbm [shape: f32[16,256], index: 2, kind: output, shape index: {}]
  %s3 = sld [smem:[#allocation0]]
  $region18: #{_lambda_.7} parent=0
    _
  %s5 = ssub.s32 1, %s3
  %s6 = scalar_select 0, %s5, %s3
  $region1: #{_lambda_.7} parent=0
    #allocation2 [shape = 'u8[16384]{0}', space=vmem, size = 0x4000, scoped, tag = 'output window, operand 0, single buffered']
    #allocation3 [shape = 's32[1]{0}', space=sflag, size = 0x4, scoped, tag = 'scoped memory for _lambda_.7']
    %7 = vsyncpa [#allocation3], 0
    // Predicated region
    $region2: #{_lambda_.7} parent=1 // pred_check
      _
    $region3: #{_lambda_.7} parent=1 // pred_check_branch
      %9 = sbr.rel (0) target = $region5
    $region4: #{_lambda_.7} parent=1 // pred_region
      _
    $region5: #{_lambda_.7} parent=1 // pred_fallthru
      _
    // Predicated region
    $region6: #{_lambda_.7} parent=1 // pred_check
      _
    $region7: #{_lambda_.7} parent=1 // pred_check_branch
      %11 = sbr.rel (0) target = $region9
    $region8: #{_lambda_.7} parent=1 // pred_region
      _
    $region9: #{_lambda_.7} parent=1 // pred_fallthru
      _
    %v13 = vld [vmem:[%s0] sm:$0xf]
    %v14 = vld [vmem:[%s0 + $0x4] sm:$0xf]
    %v15 = vld [vmem:[%s1] sm:$0xff]
    %v16 = vld [vmem:[%s1 + $0x8] sm:$0xff]
    %v17 = vld [vmem:[%s1 + $0x10] sm:$0xff]
    %v18 = vld [vmem:[%s1 + $0x18] sm:$0xff]
    %v19 = vld [vmem:[%s1 + $0x20] sm:$0xff]
    %v20 = vld [vmem:[%s1 + $0x28] sm:$0xff]
    %v21 = vld [vmem:[%s1 + $0x30] sm:$0xff]
    %v22 = vld [vmem:[%s1 + $0x38] sm:$0xff]
    %v23 = vld [vmem:[%s1 + $0x40] sm:$0xff]
    %v24 = vld [vmem:[%s1 + $0x48] sm:$0xff]
    %v25 = vld [vmem:[%s1 + $0x50] sm:$0xff]
    %v26 = vld [vmem:[%s1 + $0x58] sm:$0xff]
    %v27 = vld [vmem:[%s1 + $0x60] sm:$0xff]
    %v28 = vld [vmem:[%s1 + $0x68] sm:$0xff]
    %v29 = vld [vmem:[%s1 + $0x70] sm:$0xff]
    %v30 = vld [vmem:[%s1 + $0x78] sm:$0xff]
    %v33 = vunpack.c.l.b16 %v13
    %v34 = vunpack.c.l.b16 %v14
    %v35 = vpack.c.b16 %v34, %v33
    %v53 = vunpack.c.l.b16 %v15
    %v54 = vunpack.c.h.b16 %v15
    %v55 = vunpack.c.l.b16 %v16
    %v56 = vunpack.c.h.b16 %v16
    %v57 = vunpack.c.l.b16 %v17
    %v58 = vunpack.c.h.b16 %v17
    %v59 = vunpack.c.l.b16 %v18
    %v60 = vunpack.c.h.b16 %v18
    %v61 = vunpack.c.l.b16 %v19
    %v62 = vunpack.c.h.b16 %v19
    %v63 = vunpack.c.l.b16 %v20
    %v64 = vunpack.c.h.b16 %v20
    %v65 = vunpack.c.l.b16 %v21
    %v66 = vunpack.c.h.b16 %v21
    %v67 = vunpack.c.l.b16 %v22
    %v68 = vunpack.c.h.b16 %v22
    %v69 = vunpack.c.l.b16 %v23
    %v70 = vunpack.c.h.b16 %v23
    %v71 = vunpack.c.l.b16 %v24
    %v72 = vunpack.c.h.b16 %v24
    %v73 = vunpack.c.l.b16 %v25
    %v74 = vunpack.c.h.b16 %v25
    %v75 = vunpack.c.l.b16 %v26
    %v76 = vunpack.c.h.b16 %v26
    %v77 = vunpack.c.l.b16 %v27
    %v78 = vunpack.c.h.b16 %v27
    %v79 = vunpack.c.l.b16 %v28
    %v80 = vunpack.c.h.b16 %v28
    %v81 = vunpack.c.l.b16 %v29
    %v82 = vunpack.c.h.b16 %v29
    %v83 = vunpack.c.l.b16 %v30
    %v84 = vunpack.c.h.b16 %v30
    %v85 = vpack.c.b16 %v55, %v53
    %v86 = vpack.c.b16 %v56, %v54
    %v87 = vpack.c.b16 %v59, %v57
    %v88 = vpack.c.b16 %v60, %v58
    %v89 = vpack.c.b16 %v63, %v61
    %v90 = vpack.c.b16 %v64, %v62
    %v91 = vpack.c.b16 %v67, %v65
    %v92 = vpack.c.b16 %v68, %v66
    %v93 = vpack.c.b16 %v71, %v69
    %v94 = vpack.c.b16 %v72, %v70
    %v95 = vpack.c.b16 %v75, %v73
    %v96 = vpack.c.b16 %v76, %v74
    %v97 = vpack.c.b16 %v79, %v77
    %v98 = vpack.c.b16 %v80, %v78
    %v99 = vpack.c.b16 %v83, %v81
    %v100 = vpack.c.b16 %v84, %v82
    %117 = vmatprep.subr.bf16.mxu0 %v86
    %118 = vmatpush1.bf16.msra.mxu0 %v85
    %119 = vmatprep.subr.bf16.mxu0 %v88
    %120 = vmatpush1.bf16.msra.mxu0 %v87
    %121 = vmatprep.subr.bf16.mxu0 %v90
    %122 = vmatpush1.bf16.msra.mxu0 %v89
    %123 = vmatprep.subr.bf16.mxu0 %v92
    %124 = vmatpush1.bf16.msra.mxu0 %v91
    %125 = vmatprep.subr.bf16.mxu0 %v94
    %126 = vmatpush1.bf16.msra.mxu0 %v93
    %127 = vmatprep.subr.bf16.mxu0 %v96
    %128 = vmatpush1.bf16.msra.mxu0 %v95
    %129 = vmatprep.subr.bf16.mxu0 %v98
    %130 = vmatpush1.bf16.msra.mxu0 %v97
    %131 = vmatprep.subr.bf16.mxu0 %v100
    %132 = vmatpush1.bf16.msra.mxu0 %v99
    %133 = vmatprep.subr.bf16.mxu0 0
    %134 = vmatpush1.bf16.msra.mxu0 0
    %135 = vmatprep.subr.bf16.mxu0 0
    %136 = vmatpush1.bf16.msra.mxu0 0
    %137 = vmatprep.subr.bf16.mxu0 0
    %138 = vmatpush1.bf16.msra.mxu0 0
    %139 = vmatprep.subr.bf16.mxu0 0
    %140 = vmatpush1.bf16.msra.mxu0 0
    %141 = vmatprep.subr.bf16.mxu0 0
    %142 = vmatpush1.bf16.msra.mxu0 0
    %143 = vmatprep.subr.bf16.mxu0 0
    %144 = vmatpush1.bf16.msra.mxu0 0
    %145 = vmatprep.subr.bf16.mxu0 0
    %146 = vmatpush1.bf16.msra.mxu0 0
    %147 = vmatprep.subr.bf16.mxu0 0
    %148 = vmatpush1.bf16.msra.mxu0 0
    %149 = vmatprep.mubr.bf16.mxu0 0
    %150 = vmatmul.mubr.bf16.gmra.mrb[0].mxu0 %v35
    %v151 = vpop.f32.mrb[0].mxu0
    %v152 = vadd.f32 0.0, %v151
    %v153 = vpop.f32.mrb[0].mxu0
    %v154 = vadd.f32 0.0, %v153
    %v155 = vpop.f32.mrb[0].mxu0
    %v156 = vadd.f32 0.0, %v155
    %v157 = vpop.f32.mrb[0].mxu0
    %v158 = vadd.f32 0.0, %v157
    %159 = vdwg.mxu0
    %160 = vst [vmem:[#allocation2] sm:$0xff] %v152
    %161 = vst [vmem:[#allocation2 + $0x8] sm:$0xff] %v154
    %162 = vst [vmem:[#allocation2 + $0x10] sm:$0xff] %v156
    %163 = vst [vmem:[#allocation2 + $0x18] sm:$0xff] %v158
    // Predicated region
    $region10: #{_lambda_.7} parent=1 // pred_check
      _
    $region11: #{_lambda_.7} parent=1 // pred_check_branch
      %165 = sbr.rel (0) target = $region13
    $region12: #{_lambda_.7} parent=1 // pred_region
      %s167 = ssub.s32 512, 512
      %168 = vsyncadd [#allocation3], %s167
      %s169 = sshll.u32 [#allocation2], 4
      %s170 = int_to_ptr.vmem [resolvable:$true] %s169
      %175 = dma.vmem_to_hbm [thread:$0]  %s170, 512, %s2, [#allocation3], 256, 256, 16
    $region13: #{_lambda_.7} parent=1 // pred_fallthru
      _
    // Predicated region
    $region14: #{_lambda_.7} parent=1 // pred_check
      _
    $region15: #{_lambda_.7} parent=1 // pred_check_branch
      %177 = sbr.rel (0) target = $region17
    $region16: #{_lambda_.7} parent=1 // pred_region
      %178 = dma.done [#allocation3], 512
    $region17: #{_lambda_.7} parent=1 // pred_fallthru
      _
    %179 = vsyncpa [#allocation3], 1

// kernel: _lambda_.6
$region0: #{_lambda_.6}
  #allocation0 [shape = 'u32[]', space=smem, size = 0x4, offset = 0x4, fixed_abs, tag = 'smem constant byte address 0x4 - core index']
  #allocation1 [shape = 'u32[144,128]{1,0:T(1,128)}', space=vmem, size = 0x12000, scoped, tag = 'internal scratch']
  %s0 = inlined_call_operand.vmem [shape: bf16[16,128], index: 0, kind: input, shape index: {}]
  %s1 = inlined_call_operand.vmem [shape: f32[1,128], index: 1, kind: input, shape index: {}]
  %s2 = inlined_call_operand.vmem [shape: f32[1,128], index: 2, kind: input, shape index: {}]
  %s3 = inlined_call_operand.vmem [shape: bf16[16,128], index: 3, kind: output, shape index: {}]
  %s4 = sld [smem:[#allocation0]]
  $region22: #{_lambda_.6} parent=0
    _
  %s6 = ssub.s32 1, %s4
  %s7 = scalar_select 0, %s6, %s4
  // Predicated region
  $region2: #{_lambda_.6} parent=0 // pred_check
    _
  $region3: #{_lambda_.6} parent=0 // pred_check_branch
    %9 = sbr.rel (0) target = $region5
  $region4: #{_lambda_.6} parent=0 // pred_region
    _
  $region5: #{_lambda_.6} parent=0 // pred_fallthru
    _
  // Predicated region
  $region6: #{_lambda_.6} parent=0 // pred_check
    _
  $region7: #{_lambda_.6} parent=0 // pred_check_branch
    %11 = sbr.rel (0) target = $region9
  $region8: #{_lambda_.6} parent=0 // pred_region
    _
  $region9: #{_lambda_.6} parent=0 // pred_fallthru
    _
  // Predicated region
  $region10: #{_lambda_.6} parent=0 // pred_check
    _
  $region11: #{_lambda_.6} parent=0 // pred_check_branch
    %13 = sbr.rel (0) target = $region13
  $region12: #{_lambda_.6} parent=0 // pred_region
    _
  $region13: #{_lambda_.6} parent=0 // pred_fallthru
    _
  %v14 = vld [vmem:[%s0] sm:$0xf]
  %v15 = vld [vmem:[%s0 + $0x4] sm:$0xf]
  %v16 = vunpack.c.l.bf16 %v14
  %v17 = vunpack.c.l.bf16 %v15
  %v18 = vld [vmem:[%s1] sm:$0x1]
  %v19 = vld [vmem:[%s2] sm:$0x1]
  %20 = vadd.xlane.f32.xlu0 %v16
  %v21 = vpop.xlane.xlu0 %20
  %22 = vadd.xlane.f32.xlu0 %v17
  %v23 = vpop.xlane.xlu0 %22
  %v24 = vrcp.pop 128.0
  %v25 = vmul.f32 %v21, %v24
  %v26 = vmul.f32 %v23, %v24
  %v27 = vsub.f32 %v16, %v25
  %v28 = vsub.f32 %v17, %v26
  %v29 = vmul.f32 %v27, %v27
  %v30 = vmul.f32 %v28, %v28
  %31 = vadd.xlane.f32.xlu0 %v29
  %v32 = vpop.xlane.xlu0 %31
  %33 = vadd.xlane.f32.xlu0 %v30
  %v34 = vpop.xlane.xlu0 %33
  %v35 = vmul.f32 %v32, %v24
  %v36 = vmul.f32 %v34, %v24
  %v37 = vadd.f32 %v35, 1e-05
  %v38 = vadd.f32 %v36, 1e-05
  %v39 = vrsqrt.pop %v37
  %v40 = vrsqrt.pop %v38
  %v41 = vmul.f32 %v27, %v39
  %v42 = vmul.f32 %v28, %v40
  %v44 = vlaneseq
  %v45 = vshrl.u32 %v44, 7
  %v46 = vsub.s32 0, %v45
  %v47 = vrot.slane %v18, %v46
  %v49 = vmul.f32 %v47, %v41
  %v50 = vmul.f32 %v47, %v42
  %v52 = vlaneseq
  %v53 = vshrl.u32 %v52, 7
  %v54 = vsub.s32 0, %v53
  %v55 = vrot.slane %v19, %v54
  %v57 = vadd.f32 %v49, %v55
  %v58 = vadd.f32 %v50, %v55
  %v59 = vpack.c.bf16 %v58, %v57
  %v61 = vunpack.c.l.b16 %v59
  %v62 = vunpack.c.h.b16 %v59
  %v63 = vpack.c.b16 %v61, %v61
  %v64 = vpack.c.b16 %v62, %v62
  %67 = vst [vmem:[%s3] sm:$0xf] %v63
  %68 = vst [vmem:[%s3 + $0x4] sm:$0xf] %v64
  // Predicated region
  $region14: #{_lambda_.6} parent=0 // pred_check
    _
  $region15: #{_lambda_.6} parent=0 // pred_check_branch
    %70 = sbr.rel (0) target = $region17
  $region16: #{_lambda_.6} parent=0 // pred_region
    _
  $region17: #{_lambda_.6} parent=0 // pred_fallthru
    _
  // Predicated region
  $region18: #{_lambda_.6} parent=0 // pred_check
    _
  $region19: #{_lambda_.6} parent=0 // pred_check_branch
    %72 = sbr.rel (0) target = $region21
  $region20: #{_lambda_.6} parent=0 // pred_region
    _
  $region21: #{_lambda_.6} parent=0 // pred_fallthru
    _

// kernel: _lambda_.4
$region0: #{_lambda_.4}
  #allocation0 [shape = 'u32[]', space=smem, size = 0x4, offset = 0x4, fixed_abs, tag = 'smem constant byte address 0x4 - core index']
  #allocation1 [shape = 'u32[144,128]{1,0:T(1,128)}', space=vmem, size = 0x12000, scoped, tag = 'internal scratch']
  #allocation2 [shape = 'bf16[8,384]{1,0:T(8,128)(2,1)}', space=vmem, size = 0x1800, scoped, tag = 'scratch operand']
  %s0 = inlined_call_operand.vmem [shape: bf16[2,8,128], index: 0, kind: input, shape index: {}]
  %s1 = inlined_call_operand.vmem [shape: bf16[128,384], index: 1, kind: input, shape index: {}]
  %s2 = inlined_call_operand.vmem [shape: bf16[128,128], index: 2, kind: input, shape index: {}]
  %s3 = inlined_call_operand.vmem [shape: f32[1,128], index: 3, kind: input, shape index: {}, may-alias: {3,5,7,11}]
  %s4 = inlined_call_operand.vmem [shape: f32[1,128], index: 4, kind: input, shape index: {}, may-alias: {4,6}]
  %s5 = inlined_call_operand.vmem [shape: f32[1,128], index: 5, kind: input, shape index: {}, may-alias: {3,5,7,11}]
  %s6 = inlined_call_operand.vmem [shape: f32[1,128], index: 6, kind: input, shape index: {}, may-alias: {4,6}]
  %s7 = inlined_call_operand.vmem [shape: f32[1,128], index: 7, kind: input, shape index: {}, may-alias: {3,5,7,11}]
  %s8 = inlined_call_operand.vmem [shape: bf16[128,512], index: 8, kind: input, shape index: {}]
  %s9 = inlined_call_operand.vmem [shape: f32[1,512], index: 9, kind: input, shape index: {}]
  %s10 = inlined_call_operand.vmem [shape: bf16[512,128], index: 10, kind: input, shape index: {}]
  %s11 = inlined_call_operand.vmem [shape: f32[1,128], index: 11, kind: input, shape index: {}, may-alias: {3,5,7,11}]
  %s12 = inlined_call_operand.vmem [shape: bf16[2,8,128], index: 12, kind: output, shape index: {}]
  %s13 = sld [smem:[#allocation0]]
  $region81: #{_lambda_.4} parent=0
    _
  %s15 = ssub.s32 1, %s13
  %s16 = scalar_select 0, %s15, %s13
  loop: start=0, step=1, limit=4
  $region2: #{_lambda_.4} parent=0 // loop_pre_header
    _
  $region3: #{_lambda_.4} parent=0 // loop_header
    %s18 = sphi 0, %s22
    %p19 = scmp.ge.s32.totalorder %s18, 4
    %s28 = sphi 0, %s30
    %s31 = sphi 0, %s28
    %s32 = sphi 0, %s31
    %s48 = sphi 0, %s32
    %s52 = sphi 0, %s52
    %s54 = sphi 0, %s52
    %s55 = sphi 0, %s54
    %s69 = sphi 0, %s55
    %s73 = sphi 0, %s73
    %s75 = sphi 0, %s73
    %s76 = sphi 0, %s75
    %s90 = sphi 0, %s76
    %s94 = sphi 0, %s94
    %s96 = sphi 0, %s94
    %s97 = sphi 0, %s96
    %s111 = sphi 0, %s97
    %s115 = sphi 0, %s115
    %s117 = sphi 0, %s115
    %s118 = sphi 0, %s117
    %s132 = sphi 0, %s118
    %s136 = sphi 0, %s136
    %s138 = sphi 0, %s136
    %s139 = sphi 0, %s138
    %s153 = sphi 0, %s139
    %s157 = sphi 0, %s157
    %s159 = sphi 0, %s157
    %s160 = sphi 0, %s159
    %s174 = sphi 0, %s160
    %s178 = sphi 0, %s178
    %s180 = sphi 0, %s178
    %s181 = sphi 0, %s180
    %s195 = sphi 0, %s181
    %s199 = sphi 0, %s199
    %s201 = sphi 0, %s199
    %s202 = sphi 0, %s201
    %s216 = sphi 0, %s202
    %s220 = sphi 0, %s220
    %s222 = sphi 0, %s220
    %s223 = sphi 0, %s222
    %s237 = sphi 0, %s223
    %s241 = sphi 0, %s241
    %s243 = sphi 0, %s241
    %s244 = sphi 0, %s243
    %s258 = sphi 0, %s244
    %s262 = sphi 0, %s262
    %s264 = sphi 0, %s262
    %s265 = sphi 0, %s264
    %s279 = sphi 0, %s265
    %s285 = sphi 0, %s287
    %s288 = sphi 0, %s285
    %s289 = sphi 0, %s288
    %s305 = sphi 0, %s289
  $region4: #{_lambda_.4} parent=0 // loop_header_branch
    %21 = sbr.rel (%p19) target = $region8
  $region5: #{_lambda_.4} parent=0 // loop_body
    %s23 = ssub.s32 %s18, 1
    %s24 = ssub.s32 %s18, 2
    %s25 = sadd.s32 %s18, 1
    %s26 = ssub.s32 %s18, %s25
    %p27 = scmp.eq.s32.totalorder %s26, 0
    %s29 = sadd.s32 %s28, 1
    %s30 = scalar_select %p27, %s28, %s29
    %p33 = pneg %p27
    %p34 = scmp.eq.s32.totalorder %s18, 1
    %p35 = por %p33, %p34
    %p36 = scmp.ne.s32.totalorder %s28, %s31
    %p37 = scmp.eq.s32.totalorder %s18, 0
    %p38 = por %p36, %p37
    %p39 = scmp.ne.s32.totalorder %s28, %s31
    %p40 = scmp.eq.s32.totalorder %s23, 1
    %p41 = por %p39, %p40
    %p42 = scmp.ne.s32.totalorder %s31, %s32
    %p43 = scmp.eq.s32.totalorder %s23, 0
    %p44 = por %p42, %p43
    %p45 = scmp.ne.s32.totalorder %s31, %s32
    %p46 = scmp.eq.s32.totalorder %s24, 1
    %p47 = por %p45, %p46
    %p49 = scmp.ne.s32.totalorder %s32, %s48
    %p50 = scmp.eq.s32.totalorder %s24, 0
    %p51 = por %p49, %p50
    %s53 = sadd.s32 %s52, 1
    %p56 = scmp.eq.s32.totalorder %s18, 1
    %p57 = scmp.ne.s32.totalorder %s52, %s54
    %p58 = scmp.eq.s32.totalorder %s18, 0
    %p59 = por %p57, %p58
    %p60 = scmp.ne.s32.totalorder %s52, %s54
    %p61 = scmp.eq.s32.totalorder %s23, 1
    %p62 = por %p60, %p61
    %p63 = scmp.ne.s32.totalorder %s54, %s55
    %p64 = scmp.eq.s32.totalorder %s23, 0
    %p65 = por %p63, %p64
    %p66 = scmp.ne.s32.totalorder %s54, %s55
    %p67 = scmp.eq.s32.totalorder %s24, 1
    %p68 = por %p66, %p67
    %p70 = scmp.ne.s32.totalorder %s55, %s69
    %p71 = scmp.eq.s32.totalorder %s24, 0
    %p72 = por %p70, %p71
    %s74 = sadd.s32 %s73, 1
    %p77 = scmp.eq.s32.totalorder %s18, 1
    %p78 = scmp.ne.s32.totalorder %s73, %s75
    %p79 = scmp.eq.s32.totalorder %s18, 0
    %p80 = por %p78, %p79
    %p81 = scmp.ne.s32.totalorder %s73, %s75
    %p82 = scmp.eq.s32.totalorder %s23, 1
    %p83 = por %p81, %p82
    %p84 = scmp.ne.s32.totalorder %s75, %s76
    %p85 = scmp.eq.s32.totalorder %s23, 0
    %p86 = por %p84, %p85
    %p87 = scmp.ne.s32.totalorder %s75, %s76
    %p88 = scmp.eq.s32.totalorder %s24, 1
    %p89 = por %p87, %p88
    %p91 = scmp.ne.s32.totalorder %s76, %s90
    %p92 = scmp.eq.s32.totalorder %s24, 0
    %p93 = por %p91, %p92
    %s95 = sadd.s32 %s94, 1
    %p98 = scmp.eq.s32.totalorder %s18, 1
    %p99 = scmp.ne.s32.totalorder %s94, %s96
    %p100 = scmp.eq.s32.totalorder %s18, 0
    %p101 = por %p99, %p100
    %p102 = scmp.ne.s32.totalorder %s94, %s96
    %p103 = scmp.eq.s32.totalorder %s23, 1
    %p104 = por %p102, %p103
    %p105 = scmp.ne.s32.totalorder %s96, %s97
    %p106 = scmp.eq.s32.totalorder %s23, 0
    %p107 = por %p105, %p106
    %p108 = scmp.ne.s32.totalorder %s96, %s97
    %p109 = scmp.eq.s32.totalorder %s24, 1
    %p110 = por %p108, %p109
    %p112 = scmp.ne.s32.totalorder %s97, %s111
    %p113 = scmp.eq.s32.totalorder %s24, 0
    %p114 = por %p112, %p113
    %s116 = sadd.s32 %s115, 1
    %p119 = scmp.eq.s32.totalorder %s18, 1
    %p120 = scmp.ne.s32.totalorder %s115, %s117
    %p121 = scmp.eq.s32.totalorder %s18, 0
    %p122 = por %p120, %p121
    %p123 = scmp.ne.s32.totalorder %s115, %s117
    %p124 = scmp.eq.s32.totalorder %s23, 1
    %p125 = por %p123, %p124
    %p126 = scmp.ne.s32.totalorder %s117, %s118
    %p127 = scmp.eq.s32.totalorder %s23, 0
    %p128 = por %p126, %p127
    %p129 = scmp.ne.s32.totalorder %s117, %s118
    %p130 = scmp.eq.s32.totalorder %s24, 1
    %p131 = por %p129, %p130
    %p133 = scmp.ne.s32.totalorder %s118, %s132
    %p134 = scmp.eq.s32.totalorder %s24, 0
    %p135 = por %p133, %p134
    %s137 = sadd.s32 %s136, 1
    %p140 = scmp.eq.s32.totalorder %s18, 1
    %p141 = scmp.ne.s32.totalorder %s136, %s138
    %p142 = scmp.eq.s32.totalorder %s18, 0
    %p143 = por %p141, %p142
    %p144 = scmp.ne.s32.totalorder %s136, %s138
    %p145 = scmp.eq.s32.totalorder %s23, 1
    %p146 = por %p144, %p145
    %p147 = scmp.ne.s32.totalorder %s138, %s139
    %p148 = scmp.eq.s32.totalorder %s23, 0
    %p149 = por %p147, %p148
    %p150 = scmp.ne.s32.totalorder %s138, %s139
    %p151 = scmp.eq.s32.totalorder %s24, 1
    %p152 = por %p150, %p151
    %p154 = scmp.ne.s32.totalorder %s139, %s153
    %p155 = scmp.eq.s32.totalorder %s24, 0
    %p156 = por %p154, %p155
    %s158 = sadd.s32 %s157, 1
    %p161 = scmp.eq.s32.totalorder %s18, 1
    %p162 = scmp.ne.s32.totalorder %s157, %s159
    %p163 = scmp.eq.s32.totalorder %s18, 0
    %p164 = por %p162, %p163
    %p165 = scmp.ne.s32.totalorder %s157, %s159
    %p166 = scmp.eq.s32.totalorder %s23, 1
    %p167 = por %p165, %p166
    %p168 = scmp.ne.s32.totalorder %s159, %s160
    %p169 = scmp.eq.s32.totalorder %s23, 0
    %p170 = por %p168, %p169
    %p171 = scmp.ne.s32.totalorder %s159, %s160
    %p172 = scmp.eq.s32.totalorder %s24, 1
    %p173 = por %p171, %p172
    %p175 = scmp.ne.s32.totalorder %s160, %s174
    %p176 = scmp.eq.s32.totalorder %s24, 0
    %p177 = por %p175, %p176
    %s179 = sadd.s32 %s178, 1
    %p182 = scmp.eq.s32.totalorder %s18, 1
    %p183 = scmp.ne.s32.totalorder %s178, %s180
    %p184 = scmp.eq.s32.totalorder %s18, 0
    %p185 = por %p183, %p184
    %p186 = scmp.ne.s32.totalorder %s178, %s180
    %p187 = scmp.eq.s32.totalorder %s23, 1
    %p188 = por %p186, %p187
    %p189 = scmp.ne.s32.totalorder %s180, %s181
    %p190 = scmp.eq.s32.totalorder %s23, 0
    %p191 = por %p189, %p190
    %p192 = scmp.ne.s32.totalorder %s180, %s181
    %p193 = scmp.eq.s32.totalorder %s24, 1
    %p194 = por %p192, %p193
    %p196 = scmp.ne.s32.totalorder %s181, %s195
    %p197 = scmp.eq.s32.totalorder %s24, 0
    %p198 = por %p196, %p197
    %s200 = sadd.s32 %s199, 1
    %p203 = scmp.eq.s32.totalorder %s18, 1
    %p204 = scmp.ne.s32.totalorder %s199, %s201
    %p205 = scmp.eq.s32.totalorder %s18, 0
    %p206 = por %p204, %p205
    %p207 = scmp.ne.s32.totalorder %s199, %s201
    %p208 = scmp.eq.s32.totalorder %s23, 1
    %p209 = por %p207, %p208
    %p210 = scmp.ne.s32.totalorder %s201, %s202
    %p211 = scmp.eq.s32.totalorder %s23, 0
    %p212 = por %p210, %p211
    %p213 = scmp.ne.s32.totalorder %s201, %s202
    %p214 = scmp.eq.s32.totalorder %s24, 1
    %p215 = por %p213, %p214
    %p217 = scmp.ne.s32.totalorder %s202, %s216
    %p218 = scmp.eq.s32.totalorder %s24, 0
    %p219 = por %p217, %p218
    %s221 = sadd.s32 %s220, 1
    %p224 = scmp.eq.s32.totalorder %s18, 1
    %p225 = scmp.ne.s32.totalorder %s220, %s222
    %p226 = scmp.eq.s32.totalorder %s18, 0
    %p227 = por %p225, %p226
    %p228 = scmp.ne.s32.totalorder %s220, %s222
    %p229 = scmp.eq.s32.totalorder %s23, 1
    %p230 = por %p228, %p229
    %p231 = scmp.ne.s32.totalorder %s222, %s223
    %p232 = scmp.eq.s32.totalorder %s23, 0
    %p233 = por %p231, %p232
    %p234 = scmp.ne.s32.totalorder %s222, %s223
    %p235 = scmp.eq.s32.totalorder %s24, 1
    %p236 = por %p234, %p235
    %p238 = scmp.ne.s32.totalorder %s223, %s237
    %p239 = scmp.eq.s32.totalorder %s24, 0
    %p240 = por %p238, %p239
    %s242 = sadd.s32 %s241, 1
    %p245 = scmp.eq.s32.totalorder %s18, 1
    %p246 = scmp.ne.s32.totalorder %s241, %s243
    %p247 = scmp.eq.s32.totalorder %s18, 0
    %p248 = por %p246, %p247
    %p249 = scmp.ne.s32.totalorder %s241, %s243
    %p250 = scmp.eq.s32.totalorder %s23, 1
    %p251 = por %p249, %p250
    %p252 = scmp.ne.s32.totalorder %s243, %s244
    %p253 = scmp.eq.s32.totalorder %s23, 0
    %p254 = por %p252, %p253
    %p255 = scmp.ne.s32.totalorder %s243, %s244
    %p256 = scmp.eq.s32.totalorder %s24, 1
    %p257 = por %p255, %p256
    %p259 = scmp.ne.s32.totalorder %s244, %s258
    %p260 = scmp.eq.s32.totalorder %s24, 0
    %p261 = por %p259, %p260
    %s263 = sadd.s32 %s262, 1
    %p266 = scmp.eq.s32.totalorder %s18, 1
    %p267 = scmp.ne.s32.totalorder %s262, %s264
    %p268 = scmp.eq.s32.totalorder %s18, 0
    %p269 = por %p267, %p268
    %p270 = scmp.ne.s32.totalorder %s262, %s264
    %p271 = scmp.eq.s32.totalorder %s23, 1
    %p272 = por %p270, %p271
    %p273 = scmp.ne.s32.totalorder %s264, %s265
    %p274 = scmp.eq.s32.totalorder %s23, 0
    %p275 = por %p273, %p274
    %p276 = scmp.ne.s32.totalorder %s264, %s265
    %p277 = scmp.eq.s32.totalorder %s24, 1
    %p278 = por %p276, %p277
    %p280 = scmp.ne.s32.totalorder %s265, %s279
    %p281 = scmp.eq.s32.totalorder %s24, 0
    %p282 = por %p280, %p281
    %s283 = ssub.s32 %s18, %s25
    %p284 = scmp.eq.s32.totalorder %s283, 0
    %s286 = sadd.s32 %s285, 1
    %s287 = scalar_select %p284, %s285, %s286
    %p290 = pneg %p284
    %p291 = scmp.eq.s32.totalorder %s18, 1
    %p292 = por %p290, %p291
    %p293 = scmp.ne.s32.totalorder %s285, %s288
    %p294 = scmp.eq.s32.totalorder %s18, 0
    %p295 = por %p293, %p294
    %p296 = scmp.ne.s32.totalorder %s285, %s288
    %p297 = scmp.eq.s32.totalorder %s23, 1
    %p298 = por %p296, %p297
    %p299 = scmp.ne.s32.totalorder %s288, %s289
    %p300 = scmp.eq.s32.totalorder %s23, 0
    %p301 = por %p299, %p300
    %p302 = scmp.ne.s32.totalorder %s288, %s289
    %p303 = scmp.eq.s32.totalorder %s24, 1
    %p304 = por %p302, %p303
    %p306 = scmp.ne.s32.totalorder %s289, %s305
    %p307 = scmp.eq.s32.totalorder %s24, 0
    %p308 = por %p306, %p307
    %p309 = scmp.le.s32.totalorder 1, %s18
    %p310 = scmp.lt.s32.totalorder %s18, 3
    %p311 = pnand %p309, %p310
    %p312 = pneg %p311
    // Predicated region
    $region9: #{_lambda_.4} parent=5 // pred_check
      _
    $region10: #{_lambda_.4} parent=5 // pred_check_branch
      %314 = sbr.rel (%p311) target = $region12
    $region11: #{_lambda_.4} parent=5 // pred_region
      %s315 = ssub.s32 %s18, 1
      // Predicated region
      $region13: #{_lambda_.4} parent=11 // pred_check
        %p316 = pneg %p65
      $region14: #{_lambda_.4} parent=11 // pred_check_branch
        %318 = sbr.rel (%p316) target = $region16
      $region15: #{_lambda_.4} parent=11 // pred_region
        _
      $region16: #{_lambda_.4} parent=11 // pred_fallthru
        _
      // Predicated region
      $region17: #{_lambda_.4} parent=11 // pred_check
        %p319 = pneg %p86
      $region18: #{_lambda_.4} parent=11 // pred_check_branch
        %321 = sbr.rel (%p319) target = $region20
      $region19: #{_lambda_.4} parent=11 // pred_region
        _
      $region20: #{_lambda_.4} parent=11 // pred_fallthru
        _
      // Predicated region
      $region21: #{_lambda_.4} parent=11 // pred_check
        %p322 = pneg %p107
      $region22: #{_lambda_.4} parent=11 // pred_check_branch
        %324 = sbr.rel (%p322) target = $region24
      $region23: #{_lambda_.4} parent=11 // pred_region
        _
      $region24: #{_lambda_.4} parent=11 // pred_fallthru
        _
      // Predicated region
      $region25: #{_lambda_.4} parent=11 // pred_check
        %p325 = pneg %p128
      $region26: #{_lambda_.4} parent=11 // pred_check_branch
        %327 = sbr.rel (%p325) target = $region28
      $region27: #{_lambda_.4} parent=11 // pred_region
        _
      $region28: #{_lambda_.4} parent=11 // pred_fallthru
        _
      // Predicated region
      $region29: #{_lambda_.4} parent=11 // pred_check
        %p328 = pneg %p149
      $region30: #{_lambda_.4} parent=11 // pred_check_branch
        %330 = sbr.rel (%p328) target = $region32
      $region31: #{_lambda_.4} parent=11 // pred_region
        _
      $region32: #{_lambda_.4} parent=11 // pred_fallthru
        _
      // Predicated region
      $region33: #{_lambda_.4} parent=11 // pred_check
        %p331 = pneg %p170
      $region34: #{_lambda_.4} parent=11 // pred_check_branch
        %333 = sbr.rel (%p331) target = $region36
      $region35: #{_lambda_.4} parent=11 // pred_region
        _
      $region36: #{_lambda_.4} parent=11 // pred_fallthru
        _
      // Predicated region
      $region37: #{_lambda_.4} parent=11 // pred_check
        %p334 = pneg %p191
      $region38: #{_lambda_.4} parent=11 // pred_check_branch
        %336 = sbr.rel (%p334) target = $region40
      $region39: #{_lambda_.4} parent=11 // pred_region
        _
      $region40: #{_lambda_.4} parent=11 // pred_fallthru
        _
      // Predicated region
      $region41: #{_lambda_.4} parent=11 // pred_check
        %p337 = pneg %p212
      $region42: #{_lambda_.4} parent=11 // pred_check_branch
        %339 = sbr.rel (%p337) target = $region44
      $region43: #{_lambda_.4} parent=11 // pred_region
        _
      $region44: #{_lambda_.4} parent=11 // pred_fallthru
        _
      // Predicated region
      $region45: #{_lambda_.4} parent=11 // pred_check
        %p340 = pneg %p233
      $region46: #{_lambda_.4} parent=11 // pred_check_branch
        %342 = sbr.rel (%p340) target = $region48
      $region47: #{_lambda_.4} parent=11 // pred_region
        _
      $region48: #{_lambda_.4} parent=11 // pred_fallthru
        _
      // Predicated region
      $region49: #{_lambda_.4} parent=11 // pred_check
        %p343 = pneg %p254
      $region50: #{_lambda_.4} parent=11 // pred_check_branch
        %345 = sbr.rel (%p343) target = $region52
      $region51: #{_lambda_.4} parent=11 // pred_region
        _
      $region52: #{_lambda_.4} parent=11 // pred_fallthru
        _
      // Predicated region
      $region53: #{_lambda_.4} parent=11 // pred_check
        %p346 = pneg %p275
      $region54: #{_lambda_.4} parent=11 // pred_check_branch
        %348 = sbr.rel (%p346) target = $region56
      $region55: #{_lambda_.4} parent=11 // pred_region
        _
      $region56: #{_lambda_.4} parent=11 // pred_fallthru
        _
    $region12: #{_lambda_.4} parent=5 // pred_fallthru
      _
    %p349 = scmp.lt.s32.totalorder %s18, 2
    // Predicated region
    $region57: #{_lambda_.4} parent=5 // pred_check
      %p350 = pneg %p349
    $region58: #{_lambda_.4} parent=5 // pred_check_branch
      %352 = sbr.rel (%p350) target = $region60
    $region59: #{_lambda_.4} parent=5 // pred_region
      // Predicated region
      $region61: #{_lambda_.4} parent=59 // pred_check
        %p353 = pneg %p38
      $region62: #{_lambda_.4} parent=59 // pred_check_branch
        %355 = sbr.rel (%p353) target = $region64
      $region63: #{_lambda_.4} parent=59 // pred_region
        %p356 = scmp.lt.s32.totalorder %s18, 1
        %s357 = scalar_select %p356, %s18, 1
        %s358 = smul.addr %s357, 4
        %s359 = scalar_lea.vmem %s0, %s358
      $region64: #{_lambda_.4} parent=59 // pred_fallthru
        _
    $region60: #{_lambda_.4} parent=5 // pred_fallthru
      _
    %p360 = scmp.le.s32.totalorder 1, %s18
    %p361 = scmp.lt.s32.totalorder %s18, 3
    %p362 = pnand %p360, %p361
    %p363 = pneg %p362
    // Predicated region
    $region65: #{_lambda_.4} parent=5 // pred_check
      _
    $region66: #{_lambda_.4} parent=5 // pred_check_branch
      %365 = sbr.rel (%p362) target = $region68
    $region67: #{_lambda_.4} parent=5 // pred_region
      %s366 = ssub.s32 %s18, 1
      %p367 = scmp.lt.s32.totalorder %s23, 1
      %s368 = scalar_select %p367, %s23, 1
      %s369 = smul.addr %s368, 4
      %s370 = scalar_lea.vmem %s0, %s369
      %p371 = pneg %p44
      %p372 = pneg %p41
      %p373 = pneg %p65
      %p374 = pneg %p62
      %p375 = pneg %p86
      %p376 = pneg %p83
      %p377 = pneg %p107
      %p378 = pneg %p104
      %p379 = pneg %p128
      %p380 = pneg %p125
      %p381 = pneg %p149
      %p382 = pneg %p146
      %p383 = pneg %p170
      %p384 = pneg %p167
      %p385 = pneg %p191
      %p386 = pneg %p188
      %p387 = pneg %p212
      %p388 = pneg %p209
      %p389 = pneg %p233
      %p390 = pneg %p230
      %p391 = pneg %p254
      %p392 = pneg %p251
      %p393 = pneg %p275
      %p394 = pneg %p272
      %p395 = pneg %p301
      %p396 = pneg %p298
      %p397 = scmp.lt.s32.totalorder %s23, 1
      %s398 = scalar_select %p397, %s23, 1
      %s399 = smul.addr %s398, 4
      %s400 = scalar_lea.vmem %s12, %s399
      %p401 = scmp.lt.s32.totalorder %s23, 1
      %s402 = scalar_select %p401, %s23, 1
      %s403 = smul.addr %s402, 4
      %s404 = scalar_lea.vmem %s0, %s403
      %p405 = scmp.lt.s32.totalorder %s23, 1
      %s406 = scalar_select %p405, %s23, 1
      %s407 = smul.addr %s406, 4
      %s408 = scalar_lea.vmem %s12, %s407
      %v410 = vld [vmem:[%s404] sm:$0xf]
      %v411 = vunpack.c.l.bf16 %v410
      %v412 = vld [vmem:[%s4] sm:$0x1]
      %v413 = vld [vmem:[%s5] sm:$0x1]
      %414 = vadd.xlane.f32.xlu0 %v411
      %v415 = vpop.xlane.xlu0 %414
      %v416 = vrcp.pop 128.0
      %v417 = vmul.f32 %v415, %v416
      %v418 = vsub.f32 %v411, %v417
      %v419 = vmul.f32 %v418, %v418
      %420 = vadd.xlane.f32.xlu0 %v419
      %v421 = vpop.xlane.xlu0 %420
      %v422 = vmul.f32 %v421, %v416
      %v423 = vadd.f32 %v422, 1e-05
      %v424 = vrsqrt.pop %v423
      %v425 = vmul.f32 %v418, %v424
      %v427 = vlaneseq
      %v428 = vshrl.u32 %v427, 7
      %v429 = vsub.s32 0, %v428
      %v430 = vrot.slane %v412, %v429
      %v432 = vmul.f32 %v430, %v425
      %v434 = vlaneseq
      %v435 = vshrl.u32 %v434, 7
      %v436 = vsub.s32 0, %v435
      %v437 = vrot.slane %v413, %v436
      %v439 = vadd.f32 %v432, %v437
      %v440 = vpack.c.bf16 %v439, %v439
      %v441 = vld [vmem:[%s1] sm:$0xff]
      %v442 = vld [vmem:[%s1 + $0x8] sm:$0xf]
      %v443 = vld [vmem:[%s1 + $0xc] sm:$0xff]
      %v444 = vld [vmem:[%s1 + $0x14] sm:$0xf]
      %v445 = vld [vmem:[%s1 + $0x18] sm:$0xff]
      %v446 = vld [vmem:[%s1 + $0x20] sm:$0xf]
      %v447 = vld [vmem:[%s1 + $0x24] sm:$0xff]
      %v448 = vld [vmem:[%s1 + $0x2c] sm:$0xf]
      %v449 = vld [vmem:[%s1 + $0x30] sm:$0xff]
      %v450 = vld [vmem:[%s1 + $0x38] sm:$0xf]
      %v451 = vld [vmem:[%s1 + $0x3c] sm:$0xff]
      %v452 = vld [vmem:[%s1 + $0x44] sm:$0xf]
      %v453 = vld [vmem:[%s1 + $0x48] sm:$0xff]
      %v454 = vld [vmem:[%s1 + $0x50] sm:$0xf]
      %v455 = vld [vmem:[%s1 + $0x54] sm:$0xff]
      %v456 = vld [vmem:[%s1 + $0x5c] sm:$0xf]
      %v457 = vld [vmem:[%s1 + $0x60] sm:$0xff]
      %v458 = vld [vmem:[%s1 + $0x68] sm:$0xf]
      %v459 = vld [vmem:[%s1 + $0x6c] sm:$0xff]
      %v460 = vld [vmem:[%s1 + $0x74] sm:$0xf]
      %v461 = vld [vmem:[%s1 + $0x78] sm:$0xff]
      %v462 = vld [vmem:[%s1 + $0x80] sm:$0xf]
      %v463 = vld [vmem:[%s1 + $0x84] sm:$0xff]
      %v464 = vld [vmem:[%s1 + $0x8c] sm:$0xf]
      %v465 = vld [vmem:[%s1 + $0x90] sm:$0xff]
      %v466 = vld [vmem:[%s1 + $0x98] sm:$0xf]
      %v467 = vld [vmem:[%s1 + $0x9c] sm:$0xff]
      %v468 = vld [vmem:[%s1 + $0xa4] sm:$0xf]
      %v469 = vld [vmem:[%s1 + $0xa8] sm:$0xff]
      %v470 = vld [vmem:[%s1 + $0xb0] sm:$0xf]
      %v471 = vld [vmem:[%s1 + $0xb4] sm:$0xff]
      %v472 = vld [vmem:[%s1 + $0xbc] sm:$0xf]
      %v505 = vunpack.c.l.b16 %v441
      %v506 = vunpack.c.h.b16 %v441
      %v507 = vunpack.c.l.b16 %v442
      %v508 = vunpack.c.l.b16 %v443
      %v509 = vunpack.c.h.b16 %v443
      %v510 = vunpack.c.l.b16 %v444
      %v511 = vunpack.c.l.b16 %v445
      %v512 = vunpack.c.h.b16 %v445
      %v513 = vunpack.c.l.b16 %v446
      %v514 = vunpack.c.l.b16 %v447
      %v515 = vunpack.c.h.b16 %v447
      %v516 = vunpack.c.l.b16 %v448
      %v517 = vunpack.c.l.b16 %v449
      %v518 = vunpack.c.h.b16 %v449
      %v519 = vunpack.c.l.b16 %v450
      %v520 = vunpack.c.l.b16 %v451
      %v521 = vunpack.c.h.b16 %v451
      %v522 = vunpack.c.l.b16 %v452
      %v523 = vunpack.c.l.b16 %v453
      %v524 = vunpack.c.h.b16 %v453
      %v525 = vunpack.c.l.b16 %v454
      %v526 = vunpack.c.l.b16 %v455
      %v527 = vunpack.c.h.b16 %v455
      %v528 = vunpack.c.l.b16 %v456
      %v529 = vunpack.c.l.b16 %v457
      %v530 = vunpack.c.h.b16 %v457
      %v531 = vunpack.c.l.b16 %v458
      %v532 = vunpack.c.l.b16 %v459
      %v533 = vunpack.c.h.b16 %v459
      %v534 = vunpack.c.l.b16 %v460
      %v535 = vunpack.c.l.b16 %v461
      %v536 = vunpack.c.h.b16 %v461
      %v537 = vunpack.c.l.b16 %v462
      %v538 = vunpack.c.l.b16 %v463
      %v539 = vunpack.c.h.b16 %v463
      %v540 = vunpack.c.l.b16 %v464
      %v541 = vunpack.c.l.b16 %v465
      %v542 = vunpack.c.h.b16 %v465
      %v543 = vunpack.c.l.b16 %v466
      %v544 = vunpack.c.l.b16 %v467
      %v545 = vunpack.c.h.b16 %v467
      %v546 = vunpack.c.l.b16 %v468
      %v547 = vunpack.c.l.b16 %v469
      %v548 = vunpack.c.h.b16 %v469
      %v549 = vunpack.c.l.b16 %v470
      %v550 = vunpack.c.l.b16 %v471
      %v551 = vunpack.c.h.b16 %v471
      %v552 = vunpack.c.l.b16 %v472
      %v553 = vpack.c.b16 %v508, %v505
      %v554 = vpack.c.b16 %v509, %v506
      %v555 = vpack.c.b16 %v510, %v507
      %v556 = vpack.c.b16 %v514, %v511
      %v557 = vpack.c.b16 %v515, %v512
      %v558 = vpack.c.b16 %v516, %v513
      %v559 = vpack.c.b16 %v520, %v517
      %v560 = vpack.c.b16 %v521, %v518
      %v561 = vpack.c.b16 %v522, %v519
      %v562 = vpack.c.b16 %v526, %v523
      %v563 = vpack.c.b16 %v527, %v524
      %v564 = vpack.c.b16 %v528, %v525
      %v565 = vpack.c.b16 %v532, %v529
      %v566 = vpack.c.b16 %v533, %v530
      %v567 = vpack.c.b16 %v534, %v531
      %v568 = vpack.c.b16 %v538, %v535
      %v569 = vpack.c.b16 %v539, %v536
      %v570 = vpack.c.b16 %v540, %v537
      %v571 = vpack.c.b16 %v544, %v541
      %v572 = vpack.c.b16 %v545, %v542
      %v573 = vpack.c.b16 %v546, %v543
      %v574 = vpack.c.b16 %v550, %v547
      %v575 = vpack.c.b16 %v551, %v548
      %v576 = vpack.c.b16 %v552, %v549
      %601 = vmatprep.subr.bf16.mxu0 %v554
      %602 = vmatpush1.bf16.msra.mxu0 %v553
      %603 = vmatprep.subr.bf16.mxu0 %v557
      %604 = vmatpush1.bf16.msra.mxu0 %v556
      %605 = vmatprep.subr.bf16.mxu0 %v560
      %606 = vmatpush1.bf16.msra.mxu0 %v559
      %607 = vmatprep.subr.bf16.mxu0 %v563
      %608 = vmatpush1.bf16.msra.mxu0 %v562
      %609 = vmatprep.subr.bf16.mxu0 %v566
      %610 = vmatpush1.bf16.msra.mxu0 %v565
      %611 = vmatprep.subr.bf16.mxu0 %v569
      %612 = vmatpush1.bf16.msra.mxu0 %v568
      %613 = vmatprep.subr.bf16.mxu0 %v572
      %614 = vmatpush1.bf16.msra.mxu0 %v571
      %615 = vmatprep.subr.bf16.mxu0 %v575
      %616 = vmatpush1.bf16.msra.mxu0 %v574
      %617 = vmatprep.subr.bf16.mxu0 0
      %618 = vmatpush1.bf16.msra.mxu0 0
      %619 = vmatprep.subr.bf16.mxu0 0
      %620 = vmatpush1.bf16.msra.mxu0 0
      %621 = vmatprep.subr.bf16.mxu0 0
      %622 = vmatpush1.bf16.msra.mxu0 0
      %623 = vmatprep.subr.bf16.mxu0 0
      %624 = vmatpush1.bf16.msra.mxu0 0
      %625 = vmatprep.subr.bf16.mxu0 0
      %626 = vmatpush1.bf16.msra.mxu0 0
      %627 = vmatprep.subr.bf16.mxu0 0
      %628 = vmatpush1.bf16.msra.mxu0 0
      %629 = vmatprep.subr.bf16.mxu0 0
      %630 = vmatpush1.bf16.msra.mxu0 0
      %631 = vmatprep.subr.bf16.mxu0 0
      %632 = vmatpush1.bf16.msra.mxu0 0
      %633 = vmatprep.mubr.bf16.mxu0 0
      %634 = vmatmul.mubr.bf16.gmra.mrb[0].mxu0 %v440
      %v635 = vpop.f32.mrb[0].mxu0
      %v636 = vadd.f32 0.0, %v635
      %v637 = vpop.f32.mrb[0].mxu0
      %v638 = vadd.f32 0.0, %v637
      %v639 = vpop.f32.mrb[0].mxu0
      %v640 = vpop.f32.mrb[0].mxu0
      %641 = vdwg.mxu0
      %642 = vmatprep.subr.bf16.mxu0 0
      %643 = vmatpush1.bf16.msra.mxu0 %v555
      %644 = vmatprep.subr.bf16.mxu0 0
      %645 = vmatpush1.bf16.msra.mxu0 %v558
      %646 = vmatprep.subr.bf16.mxu0 0
      %647 = vmatpush1.bf16.msra.mxu0 %v561
      %648 = vmatprep.subr.bf16.mxu0 0
      %649 = vmatpush1.bf16.msra.mxu0 %v564
      %650 = vmatprep.subr.bf16.mxu0 0
      %651 = vmatpush1.bf16.msra.mxu0 %v567
      %652 = vmatprep.subr.bf16.mxu0 0
      %653 = vmatpush1.bf16.msra.mxu0 %v570
      %654 = vmatprep.subr.bf16.mxu0 0
      %655 = vmatpush1.bf16.msra.mxu0 %v573
      %656 = vmatprep.subr.bf16.mxu0 0
      %657 = vmatpush1.bf16.msra.mxu0 %v576
      %658 = vmatprep.subr.bf16.mxu0 0
      %659 = vmatpush1.bf16.msra.mxu0 0
      %660 = vmatprep.subr.bf16.mxu0 0
      %661 = vmatpush1.bf16.msra.mxu0 0
      %662 = vmatprep.subr.bf16.mxu0 0
      %663 = vmatpush1.bf16.msra.mxu0 0
      %664 = vmatprep.subr.bf16.mxu0 0
      %665 = vmatpush1.bf16.msra.mxu0 0
      %666 = vmatprep.subr.bf16.mxu0 0
      %667 = vmatpush1.bf16.msra.mxu0 0
      %668 = vmatprep.subr.bf16.mxu0 0
      %669 = vmatpush1.bf16.msra.mxu0 0
      %670 = vmatprep.subr.bf16.mxu0 0
      %671 = vmatpush1.bf16.msra.mxu0 0
      %672 = vmatprep.subr.bf16.mxu0 0
      %673 = vmatpush1.bf16.msra.mxu0 0
      %674 = vmatprep.mubr.bf16.mxu0 0
      %675 = vmatmul.mubr.bf16.gmra.mrb[0].mxu0 %v440
      %v676 = vpop.f32.mrb[0].mxu0
      %v677 = vadd.f32 0.0, %v676
      %v678 = vpop.f32.mrb[0].mxu0
      %v679 = vpop.f32.mrb[0].mxu0
      %v680 = vpop.f32.mrb[0].mxu0
      %681 = vdwg.mxu0
      %v682 = vpack.c.bf16 %v636, %v636
      %v683 = vpack.c.bf16 %v638, %v638
      %v684 = vpack.c.bf16 %v677, %v677
      %v688 = vunpack.c.l.b16 %v682
      %v689 = vunpack.c.l.b16 %v683
      %v690 = vunpack.c.l.b16 %v684
      %v691 = vpack.c.b16 %v689, %v688
      %v692 = vpack.c.b16 %v690, %v690
      %695 = vst [vmem:[#allocation2] sm:$0xff] %v691
      %696 = vst [vmem:[#allocation2 + $0x8] sm:$0xf] %v692
      %v697 = vlaneseq
      %v698 = vshrl.u32 %v697, 7
      %v699 = vlaneseq
      %v700 = vand.u32 %v699, 127
      %vm701 = vcmp.gt.s32.totalorder %v700, %v698
      %v702 = vld [vmem:[#allocation2] sm:$0xf]
      %v703 = vld [vmem:[#allocation2 + $0x4] sm:$0xf]
      %v704 = vld [vmem:[#allocation2 + $0x8] sm:$0xf]
      %vm705 = vcmask 261120
      %v707 = vsel %vm705, %v702, 0
      %v710 = vsel %vm705, %v703, 0
      %712 = vmatprep.subr.bf16.mxu0 0
      %713 = vmatpush1.bf16.xpose.msra.mxu0 %v710
      %714 = vmatprep.subr.bf16.mxu0 0
      %715 = vmatpush1.bf16.xpose.msra.mxu0 0
      %716 = vmatprep.subr.bf16.mxu0 0
      %717 = vmatpush1.bf16.xpose.msra.mxu0 0
      %718 = vmatprep.subr.bf16.mxu0 0
      %719 = vmatpush1.bf16.xpose.msra.mxu0 0
      %720 = vmatprep.subr.bf16.mxu0 0
      %721 = vmatpush1.bf16.xpose.msra.mxu0 0
      %722 = vmatprep.subr.bf16.mxu0 0
      %723 = vmatpush1.bf16.xpose.msra.mxu0 0
      %724 = vmatprep.subr.bf16.mxu0 0
      %725 = vmatpush1.bf16.xpose.msra.mxu0 0
      %726 = vmatprep.subr.bf16.mxu0 0
      %727 = vmatpush1.bf16.xpose.msra.mxu0 0
      %728 = vmatprep.subr.bf16.mxu0 0
      %729 = vmatpush1.bf16.xpose.msra.mxu0 0
      %730 = vmatprep.subr.bf16.mxu0 0
      %731 = vmatpush1.bf16.xpose.msra.mxu0 0
      %732 = vmatprep.subr.bf16.mxu0 0
      %733 = vmatpush1.bf16.xpose.msra.mxu0 0
      %734 = vmatprep.subr.bf16.mxu0 0
      %735 = vmatpush1.bf16.xpose.msra.mxu0 0
      %736 = vmatprep.subr.bf16.mxu0 0
      %737 = vmatpush1.bf16.xpose.msra.mxu0 0
      %738 = vmatprep.subr.bf16.mxu0 0
      %739 = vmatpush1.bf16.xpose.msra.mxu0 0
      %740 = vmatprep.subr.bf16.mxu0 0
      %741 = vmatpush1.bf16.xpose.msra.mxu0 0
      %742 = vmatprep.subr.bf16.mxu0 0
      %743 = vmatpush1.bf16.xpose.msra.mxu0 0
      %744 = vmatprep.mubr.bf16.mxu0 0
      %745 = vmatmul.mubr.bf16.gmra.mrb[0].mxu0 %v707
      %v746 = vpop.f32.mrb[0].mxu0
      %v747 = vadd.f32 0.0, %v746
      %v748 = vpop.f32.mrb[0].mxu0
      %v749 = vpop.f32.mrb[0].mxu0
      %v750 = vpop.f32.mrb[0].mxu0
      %751 = vdwg.mxu0
      %v752 = vsel %vm701, -1e+30, %v747
      %vm753 = vcmask 64512
      %v754 = vsel %vm753, %v752, -inf
      %755 = vmax.xlane.f32.xlu0 %v754
      %v756 = vpop.xlane.xlu0 %755
      %v757 = vsub.f32 %v752, %v756
      %v758 = vmul.f32 %v757, 1.442695
      %v759 = vpow.pop %v758
      %v760 = vsel %vm753, %v759, 0.0
      %761 = vadd.xlane.f32.xlu0 %v760
      %v762 = vpop.xlane.xlu0 %761
      %v763 = vrcp.pop %v762
      %v764 = vmul.f32 %v759, %v763
      %v765 = vpack.c.bf16 %v764, %v764
      %v767 = vsel %vm753, %v765, 0
      %vm769 = vcmask 1043456
      %v771 = vsel %vm769, %v704, 0
      %773 = vmatprep.subr.bf16.mxu0 0
      %774 = vmatpush1.bf16.msra.mxu0 %v771
      %775 = vmatprep.subr.bf16.mxu0 0
      %776 = vmatpush1.bf16.msra.mxu0 0
      %777 = vmatprep.subr.bf16.mxu0 0
      %778 = vmatpush1.bf16.msra.mxu0 0
      %779 = vmatprep.subr.bf16.mxu0 0
      %780 = vmatpush1.bf16.msra.mxu0 0
      %781 = vmatprep.subr.bf16.mxu0 0
      %782 = vmatpush1.bf16.msra.mxu0 0
      %783 = vmatprep.subr.bf16.mxu0 0
      %784 = vmatpush1.bf16.msra.mxu0 0
      %785 = vmatprep.subr.bf16.mxu0 0
      %786 = vmatpush1.bf16.msra.mxu0 0
      %787 = vmatprep.subr.bf16.mxu0 0
      %788 = vmatpush1.bf16.msra.mxu0 0
      %789 = vmatprep.subr.bf16.mxu0 0
      %790 = vmatpush1.bf16.msra.mxu0 0
      %791 = vmatprep.subr.bf16.mxu0 0
      %792 = vmatpush1.bf16.msra.mxu0 0
      %793 = vmatprep.subr.bf16.mxu0 0
      %794 = vmatpush1.bf16.msra.mxu0 0
      %795 = vmatprep.subr.bf16.mxu0 0
      %796 = vmatpush1.bf16.msra.mxu0 0
      %797 = vmatprep.subr.bf16.mxu0 0
      %798 = vmatpush1.bf16.msra.mxu0 0
      %799 = vmatprep.subr.bf16.mxu0 0
      %800 = vmatpush1.bf16.msra.mxu0 0
      %801 = vmatprep.subr.bf16.mxu0 0
      %802 = vmatpush1.bf16.msra.mxu0 0
      %803 = vmatprep.subr.bf16.mxu0 0
      %804 = vmatpush1.bf16.msra.mxu0 0
      %805 = vmatprep.mubr.bf16.mxu0 0
      %806 = vmatmul.mubr.bf16.gmra.mrb[0].mxu0 %v767
      %v807 = vpop.f32.mrb[0].mxu0
      %v808 = vadd.f32 0.0, %v807
      %v809 = vpop.f32.mrb[0].mxu0
      %v810 = vpop.f32.mrb[0].mxu0
      %v811 = vpop.f32.mrb[0].mxu0
      %812 = vdwg.mxu0
      %v814 = vunpack.c.l.b16 %v702
      %v815 = vpack.c.b16 %v814, %v814
      %816 = vrot.lane.b32.xlu0 %v815, 96
      %v817 = vpop.permute.xlu0 %816
      %v819 = vunpack.c.l.b16 %v703
      %v820 = vpack.c.b16 %v819, %v819
      %821 = vrot.lane.b32.xlu0 %v820, 96
      %v822 = vpop.permute.xlu0 %821
      %v824 = vsel %vm705, %v817, 0
      %v827 = vsel %vm705, %v822, 0
      %829 = vmatprep.subr.bf16.mxu0 0
      %830 = vmatpush1.bf16.xpose.msra.mxu0 %v827
      %831 = vmatprep.subr.bf16.mxu0 0
      %832 = vmatpush1.bf16.xpose.msra.mxu0 0
      %833 = vmatprep.subr.bf16.mxu0 0
      %834 = vmatpush1.bf16.xpose.msra.mxu0 0
      %835 = vmatprep.subr.bf16.mxu0 0
      %836 = vmatpush1.bf16.xpose.msra.mxu0 0
      %837 = vmatprep.subr.bf16.mxu0 0
      %838 = vmatpush1.bf16.xpose.msra.mxu0 0
      %839 = vmatprep.subr.bf16.mxu0 0
      %840 = vmatpush1.bf16.xpose.msra.mxu0 0
      %841 = vmatprep.subr.bf16.mxu0 0
      %842 = vmatpush1.bf16.xpose.msra.mxu0 0
      %843 = vmatprep.subr.bf16.mxu0 0
      %844 = vmatpush1.bf16.xpose.msra.mxu0 0
      %845 = vmatprep.subr.bf16.mxu0 0
      %846 = vmatpush1.bf16.xpose.msra.mxu0 0
      %847 = vmatprep.subr.bf16.mxu0 0
      %848 = vmatpush1.bf16.xpose.msra.mxu0 0
      %849 = vmatprep.subr.bf16.mxu0 0
      %850 = vmatpush1.bf16.xpose.msra.mxu0 0
      %851 = vmatprep.subr.bf16.mxu0 0
      %852 = vmatpush1.bf16.xpose.msra.mxu0 0
      %853 = vmatprep.subr.bf16.mxu0 0
      %854 = vmatpush1.bf16.xpose.msra.mxu0 0
      %855 = vmatprep.subr.bf16.mxu0 0
      %856 = vmatpush1.bf16.xpose.msra.mxu0 0
      %857 = vmatprep.subr.bf16.mxu0 0
      %858 = vmatpush1.bf16.xpose.msra.mxu0 0
      %859 = vmatprep.subr.bf16.mxu0 0
      %860 = vmatpush1.bf16.xpose.msra.mxu0 0
      %861 = vmatprep.mubr.bf16.mxu0 0
      %862 = vmatmul.mubr.bf16.gmra.mrb[0].mxu0 %v824
      %v863 = vpop.f32.mrb[0].mxu0
      %v864 = vadd.f32 0.0, %v863
      %v865 = vpop.f32.mrb[0].mxu0
      %v866 = vpop.f32.mrb[0].mxu0
      %v867 = vpop.f32.mrb[0].mxu0
      %868 = vdwg.mxu0
      %v869 = vsel %vm701, -1e+30, %v864
      %v870 = vsel %vm753, %v869, -inf
      %871 = vmax.xlane.f32.xlu0 %v870
      %v872 = vpop.xlane.xlu0 %871
      %v873 = vsub.f32 %v869, %v872
      %v874 = vmul.f32 %v873, 1.442695
      %v875 = vpow.pop %v874
      %v876 = vsel %vm753, %v875, 0.0
      %877 = vadd.xlane.f32.xlu0 %v876
      %v878 = vpop.xlane.xlu0 %877
      %v879 = vrcp.pop %v878
      %v880 = vmul.f32 %v875, %v879
      %v881 = vpack.c.bf16 %v880, %v880
      %v883 = vunpack.c.l.b16 %v704
      %v884 = vpack.c.b16 %v883, %v883
      %885 = vrot.lane.b32.xlu0 %v884, 96
      %v886 = vpop.permute.xlu0 %885
      %v888 = vsel %vm753, %v881, 0
      %v891 = vsel %vm769, %v886, 0
      %893 = vmatprep.subr.bf16.mxu0 0
      %894 = vmatpush1.bf16.msra.mxu0 %v891
      %895 = vmatprep.subr.bf16.mxu0 0
      %896 = vmatpush1.bf16.msra.mxu0 0
      %897 = vmatprep.subr.bf16.mxu0 0
      %898 = vmatpush1.bf16.msra.mxu0 0
      %899 = vmatprep.subr.bf16.mxu0 0
      %900 = vmatpush1.bf16.msra.mxu0 0
      %901 = vmatprep.subr.bf16.mxu0 0
      %902 = vmatpush1.bf16.msra.mxu0 0
      %903 = vmatprep.subr.bf16.mxu0 0
      %904 = vmatpush1.bf16.msra.mxu0 0
      %905 = vmatprep.subr.bf16.mxu0 0
      %906 = vmatpush1.bf16.msra.mxu0 0
      %907 = vmatprep.subr.bf16.mxu0 0
      %908 = vmatpush1.bf16.msra.mxu0 0
      %909 = vmatprep.subr.bf16.mxu0 0
      %910 = vmatpush1.bf16.msra.mxu0 0
      %911 = vmatprep.subr.bf16.mxu0 0
      %912 = vmatpush1.bf16.msra.mxu0 0
      %913 = vmatprep.subr.bf16.mxu0 0
      %914 = vmatpush1.bf16.msra.mxu0 0
      %915 = vmatprep.subr.bf16.mxu0 0
      %916 = vmatpush1.bf16.msra.mxu0 0
      %917 = vmatprep.subr.bf16.mxu0 0
      %918 = vmatpush1.bf16.msra.mxu0 0
      %919 = vmatprep.subr.bf16.mxu0 0
      %920 = vmatpush1.bf16.msra.mxu0 0
      %921 = vmatprep.subr.bf16.mxu0 0
      %922 = vmatpush1.bf16.msra.mxu0 0
      %923 = vmatprep.subr.bf16.mxu0 0
      %924 = vmatpush1.bf16.msra.mxu0 0
      %925 = vmatprep.mubr.bf16.mxu0 0
      %926 = vmatmul.mubr.bf16.gmra.mrb[0].mxu0 %v888
      %v927 = vpop.f32.mrb[0].mxu0
      %v928 = vadd.f32 0.0, %v927
      %v929 = vpop.f32.mrb[0].mxu0
      %v930 = vpop.f32.mrb[0].mxu0
      %v931 = vpop.f32.mrb[0].mxu0
      %932 = vdwg.mxu0
      %933 = vrot.lane.b32.xlu0 %v815, 64
      %v934 = vpop.permute.xlu0 %933
      %935 = vrot.lane.b32.xlu0 %v820, 64
      %v936 = vpop.permute.xlu0 %935
      %v938 = vsel %vm705, %v934, 0
      %v941 = vsel %vm705, %v936, 0
      %943 = vmatprep.subr.bf16.mxu0 0
      %944 = vmatpush1.bf16.xpose.msra.mxu0 %v941
      %945 = vmatprep.subr.bf16.mxu0 0
      %946 = vmatpush1.bf16.xpose.msra.mxu0 0
      %947 = vmatprep.subr.bf16.mxu0 0
      %948 = vmatpush1.bf16.xpose.msra.mxu0 0
      %949 = vmatprep.subr.bf16.mxu0 0
      %950 = vmatpush1.bf16.xpose.msra.mxu0 0
      %951 = vmatprep.subr.bf16.mxu0 0
      %952 = vmatpush1.bf16.xpose.msra.mxu0 0
      %953 = vmatprep.subr.bf16.mxu0 0
      %954 = vmatpush1.bf16.xpose.msra.mxu0 0
      %955 = vmatprep.subr.bf16.mxu0 0
      %956 = vmatpush1.bf16.xpose.msra.mxu0 0
      %957 = vmatprep.subr.bf16.mxu0 0
      %958 = vmatpush1.bf16.xpose.msra.mxu0 0
      %959 = vmatprep.subr.bf16.mxu0 0
      %960 = vmatpush1.bf16.xpose.msra.mxu0 0
      %961 = vmatprep.subr.bf16.mxu0 0
      %962 = vmatpush1.bf16.xpose.msra.mxu0 0
      %963 = vmatprep.subr.bf16.mxu0 0
      %964 = vmatpush1.bf16.xpose.msra.mxu0 0
      %965 = vmatprep.subr.bf16.mxu0 0
      %966 = vmatpush1.bf16.xpose.msra.mxu0 0
      %967 = vmatprep.subr.bf16.mxu0 0
      %968 = vmatpush1.bf16.xpose.msra.mxu0 0
      %969 = vmatprep.subr.bf16.mxu0 0
      %970 = vmatpush1.bf16.xpose.msra.mxu0 0
      %971 = vmatprep.subr.bf16.mxu0 0
      %972 = vmatpush1.bf16.xpose.msra.mxu0 0
      %973 = vmatprep.subr.bf16.mxu0 0
      %974 = vmatpush1.bf16.xpose.msra.mxu0 0
      %975 = vmatprep.mubr.bf16.mxu0 0
      %976 = vmatmul.mubr.bf16.gmra.mrb[0].mxu0 %v938
      %v977 = vpop.f32.mrb[0].mxu0
      %v978 = vadd.f32 0.0, %v977
      %v979 = vpop.f32.mrb[0].mxu0
      %v980 = vpop.f32.mrb[0].mxu0
      %v981 = vpop.f32.mrb[0].mxu0
      %982 = vdwg.mxu0
      %v983 = vsel %vm701, -1e+30, %v978
      %v984 = vsel %vm753, %v983, -inf
      %985 = vmax.xlane.f32.xlu0 %v984
      %v986 = vpop.xlane.xlu0 %985
      %v987 = vsub.f32 %v983, %v986
      %v988 = vmul.f32 %v987, 1.442695
      %v989 = vpow.pop %v988
      %v990 = vsel %vm753, %v989, 0.0
      %991 = vadd.xlane.f32.xlu0 %v990
      %v992 = vpop.xlane.xlu0 %991
      %v993 = vrcp.pop %v992
      %v994 = vmul.f32 %v989, %v993
      %v995 = vpack.c.bf16 %v994, %v994
      %996 = vrot.lane.b32.xlu0 %v884, 64
      %v997 = vpop.permute.xlu0 %996
      %v999 = vsel %vm753, %v995, 0
      %v1002 = vsel %vm769, %v997, 0
      %1004 = vmatprep.subr.bf16.mxu0 0
      %1005 = vmatpush1.bf16.msra.mxu0 %v1002
      %1006 = vmatprep.subr.bf16.mxu0 0
      %1007 = vmatpush1.bf16.msra.mxu0 0
      %1008 = vmatprep.subr.bf16.mxu0 0
      %1009 = vmatpush1.bf16.msra.mxu0 0
      %1010 = vmatprep.subr.bf16.mxu0 0
      %1011 = vmatpush1.bf16.msra.mxu0 0
      %1012 = vmatprep.subr.bf16.mxu0 0
      %1013 = vmatpush1.bf16.msra.mxu0 0
      %1014 = vmatprep.subr.bf16.mxu0 0
      %1015 = vmatpush1.bf16.msra.mxu0 0
      %1016 = vmatprep.subr.bf16.mxu0 0
      %1017 = vmatpush1.bf16.msra.mxu0 0
      %1018 = vmatprep.subr.bf16.mxu0 0
      %1019 = vmatpush1.bf16.msra.mxu0 0
      %1020 = vmatprep.subr.bf16.mxu0 0
      %1021 = vmatpush1.bf16.msra.mxu0 0
      %1022 = vmatprep.subr.bf16.mxu0 0
      %1023 = vmatpush1.bf16.msra.mxu0 0
      %1024 = vmatprep.subr.bf16.mxu0 0
      %1025 = vmatpush1.bf16.msra.mxu0 0
      %1026 = vmatprep.subr.bf16.mxu0 0
      %1027 = vmatpush1.bf16.msra.mxu0 0
      %1028 = vmatprep.subr.bf16.mxu0 0
      %1029 = vmatpush1.bf16.msra.mxu0 0
      %1030 = vmatprep.subr.bf16.mxu0 0
      %1031 = vmatpush1.bf16.msra.mxu0 0
      %1032 = vmatprep.subr.bf16.mxu0 0
      %1033 = vmatpush1.bf16.msra.mxu0 0
      %1034 = vmatprep.subr.bf16.mxu0 0
      %1035 = vmatpush1.bf16.msra.mxu0 0
      %1036 = vmatprep.mubr.bf16.mxu0 0
      %1037 = vmatmul.mubr.bf16.gmra.mrb[0].mxu0 %v999
      %v1038 = vpop.f32.mrb[0].mxu0
      %v1039 = vadd.f32 0.0, %v1038
      %v1040 = vpop.f32.mrb[0].mxu0
      %v1041 = vpop.f32.mrb[0].mxu0
      %v1042 = vpop.f32.mrb[0].mxu0
      %1043 = vdwg.mxu0
      %1044 = vrot.lane.b32.xlu0 %v815, 32
      %v1045 = vpop.permute.xlu0 %1044
      %1046 = vrot.lane.b32.xlu0 %v820, 32
      %v1047 = vpop.permute.xlu0 %1046
      %v1049 = vsel %vm705, %v1045, 0
      %v1052 = vsel %vm705, %v1047, 0
      %1054 = vmatprep.subr.bf16.mxu0 0
      %1055 = vmatpush1.bf16.xpose.msra.mxu0 %v1052
      %1056 = vmatprep.subr.bf16.mxu0 0
      %1057 = vmatpush1.bf16.xpose.msra.mxu0 0
      %1058 = vmatprep.subr.bf16.mxu0 0
      %1059 = vmatpush1.bf16.xpose.msra.mxu0 0
      %1060 = vmatprep.subr.bf16.mxu0 0
      %1061 = vmatpush1.bf16.xpose.msra.mxu0 0
      %1062 = vmatprep.subr.bf16.mxu0 0
      %1063 = vmatpush1.bf16.xpose.msra.mxu0 0
      %1064 = vmatprep.subr.bf16.mxu0 0
      %1065 = vmatpush1.bf16.xpose.msra.mxu0 0
      %1066 = vmatprep.subr.bf16.mxu0 0
      %1067 = vmatpush1.bf16.xpose.msra.mxu0 0
      %1068 = vmatprep.subr.bf16.mxu0 0
      %1069 = vmatpush1.bf16.xpose.msra.mxu0 0
      %1070 = vmatprep.subr.bf16.mxu0 0
      %1071 = vmatpush1.bf16.xpose.msra.mxu0 0
      %1072 = vmatprep.subr.bf16.mxu0 0
      %1073 = vmatpush1.bf16.xpose.msra.mxu0 0
      %1074 = vmatprep.subr.bf16.mxu0 0
      %1075 = vmatpush1.bf16.xpose.msra.mxu0 0
      %1076 = vmatprep.subr.bf16.mxu0 0
      %1077 = vmatpush1.bf16.xpose.msra.mxu0 0
      %1078 = vmatprep.subr.bf16.mxu0 0
      %1079 = vmatpush1.bf16.xpose.msra.mxu0 0
      %1080 = vmatprep.subr.bf16.mxu0 0
      %1081 = vmatpush1.bf16.xpose.msra.mxu0 0
      %1082 = vmatprep.subr.bf16.mxu0 0
      %1083 = vmatpush1.bf16.xpose.msra.mxu0 0
      %1084 = vmatprep.subr.bf16.mxu0 0
      %1085 = vmatpush1.bf16.xpose.msra.mxu0 0
      %1086 = vmatprep.mubr.bf16.mxu0 0
      %1087 = vmatmul.mubr.bf16.gmra.mrb[0].mxu0 %v1049
      %v1088 = vpop.f32.mrb[0].mxu0
      %v1089 = vadd.f32 0.0, %v1088
      %v1090 = vpop.f32.mrb[0].mxu0
      %v1091 = vpop.f32.mrb[0].mxu0
      %v1092 = vpop.f32.mrb[0].mxu0
      %1093 = vdwg.mxu0
      %v1094 = vsel %vm701, -1e+30, %v1089
      %v1095 = vsel %vm753, %v1094, -inf
      %1096 = vmax.xlane.f32.xlu0 %v1095
      %v1097 = vpop.xlane.xlu0 %1096
      %v1098 = vsub.f32 %v1094, %v1097
      %v1099 = vmul.f32 %v1098, 1.442695
      %v1100 = vpow.pop %v1099
      %v1101 = vsel %vm753, %v1100, 0.0
      %1102 = vadd.xlane.f32.xlu0 %v1101
      %v1103 = vpop.xlane.xlu0 %1102
      %v1104 = vrcp.pop %v1103
      %v1105 = vmul.f32 %v1100, %v1104
      %v1106 = vpack.c.bf16 %v1105, %v1105
      %1107 = vrot.lane.b32.xlu0 %v884, 32
      %v1108 = vpop.permute.xlu0 %1107
      %v1110 = vsel %vm753, %v1106, 0
      %v1113 = vsel %vm769, %v1108, 0
      %1115 = vmatprep.subr.bf16.mxu0 0
      %1116 = vmatpush1.bf16.msra.mxu0 %v1113
      %1117 = vmatprep.subr.bf16.mxu0 0
      %1118 = vmatpush1.bf16.msra.mxu0 0
      %1119 = vmatprep.subr.bf16.mxu0 0
      %1120 = vmatpush1.bf16.msra.mxu0 0
      %1121 = vmatprep.subr.bf16.mxu0 0
      %1122 = vmatpush1.bf16.msra.mxu0 0
      %1123 = vmatprep.subr.bf16.mxu0 0
      %1124 = vmatpush1.bf16.msra.mxu0 0
      %1125 = vmatprep.subr.bf16.mxu0 0
      %1126 = vmatpush1.bf16.msra.mxu0 0
      %1127 = vmatprep.subr.bf16.mxu0 0
      %1128 = vmatpush1.bf16.msra.mxu0 0
      %1129 = vmatprep.subr.bf16.mxu0 0
      %1130 = vmatpush1.bf16.msra.mxu0 0
      %1131 = vmatprep.subr.bf16.mxu0 0
      %1132 = vmatpush1.bf16.msra.mxu0 0
      %1133 = vmatprep.subr.bf16.mxu0 0
      %1134 = vmatpush1.bf16.msra.mxu0 0
      %1135 = vmatprep.subr.bf16.mxu0 0
      %1136 = vmatpush1.bf16.msra.mxu0 0
      %1137 = vmatprep.subr.bf16.mxu0 0
      %1138 = vmatpush1.bf16.msra.mxu0 0
      %1139 = vmatprep.subr.bf16.mxu0 0
      %1140 = vmatpush1.bf16.msra.mxu0 0
      %1141 = vmatprep.subr.bf16.mxu0 0
      %1142 = vmatpush1.bf16.msra.mxu0 0
      %1143 = vmatprep.subr.bf16.mxu0 0
      %1144 = vmatpush1.bf16.msra.mxu0 0
      %1145 = vmatprep.subr.bf16.mxu0 0
      %1146 = vmatpush1.bf16.msra.mxu0 0
      %1147 = vmatprep.mubr.bf16.mxu0 0
      %1148 = vmatmul.mubr.bf16.gmra.mrb[0].mxu0 %v1110
      %v1149 = vpop.f32.mrb[0].mxu0
      %v1150 = vadd.f32 0.0, %v1149
      %v1151 = vpop.f32.mrb[0].mxu0
      %v1152 = vpop.f32.mrb[0].mxu0
      %v1153 = vpop.f32.mrb[0].mxu0
      %1154 = vdwg.mxu0
      %1156 = vrot.lane.b32.xlu0 %v928, 32
      %v1157 = vpop.permute.xlu0 %1156
      %1160 = vrot.lane.b32.xlu0 %v1039, 64
      %v1161 = vpop.permute.xlu0 %1160
      %1164 = vrot.lane.b32.xlu0 %v1150, 96
      %v1165 = vpop.permute.xlu0 %1164
      %v1167 = vsel %vm705, %v808, %v1157
      %vm1168 = vcmask 523264
      %v1169 = vsel %vm1168, %v1167, %v1161
      %vm1170 = vcmask 785408
      %v1171 = vsel %vm1170, %v1169, %v1165
      %v1172 = vpack.c.bf16 %v1171, %v1171
      %v1173 = vld [vmem:[%s2] sm:$0xf]
      %v1174 = vld [vmem:[%s2 + $0x4] sm:$0xf]
      %v1175 = vld [vmem:[%s2 + $0x8] sm:$0xf]
      %v1176 = vld [vmem:[%s2 + $0xc] sm:$0xf]
      %v1177 = vld [vmem:[%s2 + $0x10] sm:$0xf]
      %v1178 = vld [vmem:[%s2 + $0x14] sm:$0xf]
      %v1179 = vld [vmem:[%s2 + $0x18] sm:$0xf]
      %v1180 = vld [vmem:[%s2 + $0x1c] sm:$0xf]
      %v1181 = vld [vmem:[%s2 + $0x20] sm:$0xf]
      %v1182 = vld [vmem:[%s2 + $0x24] sm:$0xf]
      %v1183 = vld [vmem:[%s2 + $0x28] sm:$0xf]
      %v1184 = vld [vmem:[%s2 + $0x2c] sm:$0xf]
      %v1185 = vld [vmem:[%s2 + $0x30] sm:$0xf]
      %v1186 = vld [vmem:[%s2 + $0x34] sm:$0xf]
      %v1187 = vld [vmem:[%s2 + $0x38] sm:$0xf]
      %v1188 = vld [vmem:[%s2 + $0x3c] sm:$0xf]
      %v1189 = vld [vmem:[%s3] sm:$0x1]
      %v1191 = vlaneseq
      %v1192 = vshrl.u32 %v1191, 7
      %v1193 = vsub.s32 0, %v1192
      %v1194 = vrot.slane %v1189, %v1193
      %v1212 = vunpack.c.l.b16 %v1173
      %v1213 = vunpack.c.l.b16 %v1174
      %v1214 = vunpack.c.l.b16 %v1175
      %v1215 = vunpack.c.l.b16 %v1176
      %v1216 = vunpack.c.l.b16 %v1177
      %v1217 = vunpack.c.l.b16 %v1178
      %v1218 = vunpack.c.l.b16 %v1179
      %v1219 = vunpack.c.l.b16 %v1180
      %v1220 = vunpack.c.l.b16 %v1181
      %v1221 = vunpack.c.l.b16 %v1182
      %v1222 = vunpack.c.l.b16 %v1183
      %v1223 = vunpack.c.l.b16 %v1184
      %v1224 = vunpack.c.l.b16 %v1185
      %v1225 = vunpack.c.l.b16 %v1186
      %v1226 = vunpack.c.l.b16 %v1187
      %v1227 = vunpack.c.l.b16 %v1188
      %v1228 = vpack.c.b16 %v1213, %v1212
      %v1229 = vpack.c.b16 %v1215, %v1214
      %v1230 = vpack.c.b16 %v1217, %v1216
      %v1231 = vpack.c.b16 %v1219, %v1218
      %v1232 = vpack.c.b16 %v1221, %v1220
      %v1233 = vpack.c.b16 %v1223, %v1222
      %v1234 = vpack.c.b16 %v1225, %v1224
      %v1235 = vpack.c.b16 %v1227, %v1226
      %1244 = vmatprep.subr.bf16.mxu0 0
      %1245 = vmatpush1.bf16.msra.mxu0 %v1228
      %1246 = vmatprep.subr.bf16.mxu0 0
      %1247 = vmatpush1.bf16.msra.mxu0 %v1229
      %1248 = vmatprep.subr.bf16.mxu0 0
      %1249 = vmatpush1.bf16.msra.mxu0 %v1230
      %1250 = vmatprep.subr.bf16.mxu0 0
      %1251 = vmatpush1.bf16.msra.mxu0 %v1231
      %1252 = vmatprep.subr.bf16.mxu0 0
      %1253 = vmatpush1.bf16.msra.mxu0 %v1232
      %1254 = vmatprep.subr.bf16.mxu0 0
      %1255 = vmatpush1.bf16.msra.mxu0 %v1233
      %1256 = vmatprep.subr.bf16.mxu0 0
      %1257 = vmatpush1.bf16.msra.mxu0 %v1234
      %1258 = vmatprep.subr.bf16.mxu0 0
      %1259 = vmatpush1.bf16.msra.mxu0 %v1235
      %1260 = vmatprep.subr.bf16.mxu0 0
      %1261 = vmatpush1.bf16.msra.mxu0 0
      %1262 = vmatprep.subr.bf16.mxu0 0
      %1263 = vmatpush1.bf16.msra.mxu0 0
      %1264 = vmatprep.subr.bf16.mxu0 0
      %1265 = vmatpush1.bf16.msra.mxu0 0
      %1266 = vmatprep.subr.bf16.mxu0 0
      %1267 = vmatpush1.bf16.msra.mxu0 0
      %1268 = vmatprep.subr.bf16.mxu0 0
      %1269 = vmatpush1.bf16.msra.mxu0 0
      %1270 = vmatprep.subr.bf16.mxu0 0
      %1271 = vmatpush1.bf16.msra.mxu0 0
      %1272 = vmatprep.subr.bf16.mxu0 0
      %1273 = vmatpush1.bf16.msra.mxu0 0
      %1274 = vmatprep.subr.bf16.mxu0 0
      %1275 = vmatpush1.bf16.msra.mxu0 0
      %1276 = vmatprep.mubr.bf16.mxu0 0
      %1277 = vmatmul.mubr.bf16.gmra.mrb[0].mxu0 %v1172
      %v1278 = vpop.f32.mrb[0].mxu0
      %v1279 = vadd.f32 %v1194, %v1278
      %v1280 = vpop.f32.mrb[0].mxu0
      %v1281 = vpop.f32.mrb[0].mxu0
      %v1282 = vpop.f32.mrb[0].mxu0
      %1283 = vdwg.mxu0
      %v1284 = vadd.f32 %v411, %v1279
      %v1285 = vld [vmem:[%s6] sm:$0x1]
      %v1286 = vld [vmem:[%s7] sm:$0x1]
      %1287 = vadd.xlane.f32.xlu0 %v1284
      %v1288 = vpop.xlane.xlu0 %1287
      %v1289 = vmul.f32 %v1288, %v416
      %v1290 = vsub.f32 %v1284, %v1289
      %v1291 = vmul.f32 %v1290, %v1290
      %1292 = vadd.xlane.f32.xlu0 %v1291
      %v1293 = vpop.xlane.xlu0 %1292
      %v1294 = vmul.f32 %v1293, %v416
      %v1295 = vadd.f32 %v1294, 1e-05
      %v1296 = vrsqrt.pop %v1295
      %v1297 = vmul.f32 %v1290, %v1296
      %v1299 = vlaneseq
      %v1300 = vshrl.u32 %v1299, 7
      %v1301 = vsub.s32 0, %v1300
      %v1302 = vrot.slane %v1285, %v1301
      %v1304 = vmul.f32 %v1302, %v1297
      %v1306 = vlaneseq
      %v1307 = vshrl.u32 %v1306, 7
      %v1308 = vsub.s32 0, %v1307
      %v1309 = vrot.slane %v1286, %v1308
      %v1311 = vadd.f32 %v1304, %v1309
      %v1312 = vpack.c.bf16 %v1311, %v1311
      %v1313 = vld [vmem:[%s8] sm:$0xff]
      %v1314 = vld [vmem:[%s8 + $0x8] sm:$0xff]
      %v1315 = vld [vmem:[%s8 + $0x10] sm:$0xff]
      %v1316 = vld [vmem:[%s8 + $0x18] sm:$0xff]
      %v1317 = vld [vmem:[%s8 + $0x20] sm:$0xff]
      %v1318 = vld [vmem:[%s8 + $0x28] sm:$0xff]
      %v1319 = vld [vmem:[%s8 + $0x30] sm:$0xff]
      %v1320 = vld [vmem:[%s8 + $0x38] sm:$0xff]
      %v1321 = vld [vmem:[%s8 + $0x40] sm:$0xff]
      %v1322 = vld [vmem:[%s8 + $0x48] sm:$0xff]
      %v1323 = vld [vmem:[%s8 + $0x50] sm:$0xff]
      %v1324 = vld [vmem:[%s8 + $0x58] sm:$0xff]
      %v1325 = vld [vmem:[%s8 + $0x60] sm:$0xff]
      %v1326 = vld [vmem:[%s8 + $0x68] sm:$0xff]
      %v1327 = vld [vmem:[%s8 + $0x70] sm:$0xff]
      %v1328 = vld [vmem:[%s8 + $0x78] sm:$0xff]
      %v1329 = vld [vmem:[%s8 + $0x80] sm:$0xff]
      %v1330 = vld [vmem:[%s8 + $0x88] sm:$0xff]
      %v1331 = vld [vmem:[%s8 + $0x90] sm:$0xff]
      %v1332 = vld [vmem:[%s8 + $0x98] sm:$0xff]
      %v1333 = vld [vmem:[%s8 + $0xa0] sm:$0xff]
      %v1334 = vld [vmem:[%s8 + $0xa8] sm:$0xff]
      %v1335 = vld [vmem:[%s8 + $0xb0] sm:$0xff]
      %v1336 = vld [vmem:[%s8 + $0xb8] sm:$0xff]
      %v1337 = vld [vmem:[%s8 + $0xc0] sm:$0xff]
      %v1338 = vld [vmem:[%s8 + $0xc8] sm:$0xff]
      %v1339 = vld [vmem:[%s8 + $0xd0] sm:$0xff]
      %v1340 = vld [vmem:[%s8 + $0xd8] sm:$0xff]
      %v1341 = vld [vmem:[%s8 + $0xe0] sm:$0xff]
      %v1342 = vld [vmem:[%s8 + $0xe8] sm:$0xff]
      %v1343 = vld [vmem:[%s8 + $0xf0] sm:$0xff]
      %v1344 = vld [vmem:[%s8 + $0xf8] sm:$0xff]
      %v1345 = vld [vmem:[%s9] sm:$0xf]
      %v1347 = vlaneseq
      %v1348 = vshrl.u32 %v1347, 7
      %v1349 = vsub.s32 0, %v1348
      %v1350 = vrot.slane %v1345, %v1349
      %v1351 = vlaneseq
      %v1352 = vshrl.u32 %v1351, 7
      %v1353 = vsub.s32 1, %v1352
      %v1354 = vrot.slane %v1345, %v1353
      %v1355 = vlaneseq
      %v1356 = vshrl.u32 %v1355, 7
      %v1357 = vsub.s32 2, %v1356
      %v1358 = vrot.slane %v1345, %v1357
      %v1359 = vlaneseq
      %v1360 = vshrl.u32 %v1359, 7
      %v1361 = vsub.s32 3, %v1360
      %v1362 = vrot.slane %v1345, %v1361
      %v1399 = vunpack.c.l.b16 %v1313
      %v1400 = vunpack.c.h.b16 %v1313
      %v1401 = vunpack.c.l.b16 %v1314
      %v1402 = vunpack.c.h.b16 %v1314
      %v1403 = vunpack.c.l.b16 %v1315
      %v1404 = vunpack.c.h.b16 %v1315
      %v1405 = vunpack.c.l.b16 %v1316
      %v1406 = vunpack.c.h.b16 %v1316
      %v1407 = vunpack.c.l.b16 %v1317
      %v1408 = vunpack.c.h.b16 %v1317
      %v1409 = vunpack.c.l.b16 %v1318
      %v1410 = vunpack.c.h.b16 %v1318
      %v1411 = vunpack.c.l.b16 %v1319
      %v1412 = vunpack.c.h.b16 %v1319
      %v1413 = vunpack.c.l.b16 %v1320
      %v1414 = vunpack.c.h.b16 %v1320
      %v1415 = vunpack.c.l.b16 %v1321
      %v1416 = vunpack.c.h.b16 %v1321
      %v1417 = vunpack.c.l.b16 %v1322
      %v1418 = vunpack.c.h.b16 %v1322
      %v1419 = vunpack.c.l.b16 %v1323
      %v1420 = vunpack.c.h.b16 %v1323
      %v1421 = vunpack.c.l.b16 %v1324
      %v1422 = vunpack.c.h.b16 %v1324
      %v1423 = vunpack.c.l.b16 %v1325
      %v1424 = vunpack.c.h.b16 %v1325
      %v1425 = vunpack.c.l.b16 %v1326
      %v1426 = vunpack.c.h.b16 %v1326
      %v1427 = vunpack.c.l.b16 %v1327
      %v1428 = vunpack.c.h.b16 %v1327
      %v1429 = vunpack.c.l.b16 %v1328
      %v1430 = vunpack.c.h.b16 %v1328
      %v1431 = vunpack.c.l.b16 %v1329
      %v1432 = vunpack.c.h.b16 %v1329
      %v1433 = vunpack.c.l.b16 %v1330
      %v1434 = vunpack.c.h.b16 %v1330
      %v1435 = vunpack.c.l.b16 %v1331
      %v1436 = vunpack.c.h.b16 %v1331
      %v1437 = vunpack.c.l.b16 %v1332
      %v1438 = vunpack.c.h.b16 %v1332
      %v1439 = vunpack.c.l.b16 %v1333
      %v1440 = vunpack.c.h.b16 %v1333
      %v1441 = vunpack.c.l.b16 %v1334
      %v1442 = vunpack.c.h.b16 %v1334
      %v1443 = vunpack.c.l.b16 %v1335
      %v1444 = vunpack.c.h.b16 %v1335
      %v1445 = vunpack.c.l.b16 %v1336
      %v1446 = vunpack.c.h.b16 %v1336
      %v1447 = vunpack.c.l.b16 %v1337
      %v1448 = vunpack.c.h.b16 %v1337
      %v1449 = vunpack.c.l.b16 %v1338
      %v1450 = vunpack.c.h.b16 %v1338
      %v1451 = vunpack.c.l.b16 %v1339
      %v1452 = vunpack.c.h.b16 %v1339
      %v1453 = vunpack.c.l.b16 %v1340
      %v1454 = vunpack.c.h.b16 %v1340
      %v1455 = vunpack.c.l.b16 %v1341
      %v1456 = vunpack.c.h.b16 %v1341
      %v1457 = vunpack.c.l.b16 %v1342
      %v1458 = vunpack.c.h.b16 %v1342
      %v1459 = vunpack.c.l.b16 %v1343
      %v1460 = vunpack.c.h.b16 %v1343
      %v1461 = vunpack.c.l.b16 %v1344
      %v1462 = vunpack.c.h.b16 %v1344
      %v1463 = vpack.c.b16 %v1403, %v1399
      %v1464 = vpack.c.b16 %v1404, %v1400
      %v1465 = vpack.c.b16 %v1405, %v1401
      %v1466 = vpack.c.b16 %v1406, %v1402
      %v1467 = vpack.c.b16 %v1411, %v1407
      %v1468 = vpack.c.b16 %v1412, %v1408
      %v1469 = vpack.c.b16 %v1413, %v1409
      %v1470 = vpack.c.b16 %v1414, %v1410
      %v1471 = vpack.c.b16 %v1419, %v1415
      %v1472 = vpack.c.b16 %v1420, %v1416
      %v1473 = vpack.c.b16 %v1421, %v1417
      %v1474 = vpack.c.b16 %v1422, %v1418
      %v1475 = vpack.c.b16 %v1427, %v1423
      %v1476 = vpack.c.b16 %v1428, %v1424
      %v1477 = vpack.c.b16 %v1429, %v1425
      %v1478 = vpack.c.b16 %v1430, %v1426
      %v1479 = vpack.c.b16 %v1435, %v1431
      %v1480 = vpack.c.b16 %v1436, %v1432
      %v1481 = vpack.c.b16 %v1437, %v1433
      %v1482 = vpack.c.b16 %v1438, %v1434
      %v1483 = vpack.c.b16 %v1443, %v1439
      %v1484 = vpack.c.b16 %v1444, %v1440
      %v1485 = vpack.c.b16 %v1445, %v1441
      %v1486 = vpack.c.b16 %v1446, %v1442
      %v1487 = vpack.c.b16 %v1451, %v1447
      %v1488 = vpack.c.b16 %v1452, %v1448
      %v1489 = vpack.c.b16 %v1453, %v1449
      %v1490 = vpack.c.b16 %v1454, %v1450
      %v1491 = vpack.c.b16 %v1459, %v1455
      %v1492 = vpack.c.b16 %v1460, %v1456
      %v1493 = vpack.c.b16 %v1461, %v1457
      %v1494 = vpack.c.b16 %v1462, %v1458
      %1527 = vmatprep.subr.bf16.mxu0 %v1464
      %1528 = vmatpush1.bf16.msra.mxu0 %v1463
      %1529 = vmatprep.subr.bf16.mxu0 %v1468
      %1530 = vmatpush1.bf16.msra.mxu0 %v1467
      %1531 = vmatprep.subr.bf16.mxu0 %v1472
      %1532 = vmatpush1.bf16.msra.mxu0 %v1471
      %1533 = vmatprep.subr.bf16.mxu0 %v1476
      %1534 = vmatpush1.bf16.msra.mxu0 %v1475
      %1535 = vmatprep.subr.bf16.mxu0 %v1480
      %1536 = vmatpush1.bf16.msra.mxu0 %v1479
      %1537 = vmatprep.subr.bf16.mxu0 %v1484
      %1538 = vmatpush1.bf16.msra.mxu0 %v1483
      %1539 = vmatprep.subr.bf16.mxu0 %v1488
      %1540 = vmatpush1.bf16.msra.mxu0 %v1487
      %1541 = vmatprep.subr.bf16.mxu0 %v1492
      %1542 = vmatpush1.bf16.msra.mxu0 %v1491
      %1543 = vmatprep.subr.bf16.mxu0 0
      %1544 = vmatpush1.bf16.msra.mxu0 0
      %1545 = vmatprep.subr.bf16.mxu0 0
      %1546 = vmatpush1.bf16.msra.mxu0 0
      %1547 = vmatprep.subr.bf16.mxu0 0
      %1548 = vmatpush1.bf16.msra.mxu0 0
      %1549 = vmatprep.subr.bf16.mxu0 0
      %1550 = vmatpush1.bf16.msra.mxu0 0
      %1551 = vmatprep.subr.bf16.mxu0 0
      %1552 = vmatpush1.bf16.msra.mxu0 0
      %1553 = vmatprep.subr.bf16.mxu0 0
      %1554 = vmatpush1.bf16.msra.mxu0 0
      %1555 = vmatprep.subr.bf16.mxu0 0
      %1556 = vmatpush1.bf16.msra.mxu0 0
      %1557 = vmatprep.subr.bf16.mxu0 0
      %1558 = vmatpush1.bf16.msra.mxu0 0
      %1559 = vmatprep.mubr.bf16.mxu0 0
      %1560 = vmatmul.mubr.bf16.gmra.mrb[0].mxu0 %v1312
      %v1561 = vpop.f32.mrb[0].mxu0
      %v1562 = vadd.f32 %v1350, %v1561
      %v1563 = vpop.f32.mrb[0].mxu0
      %v1564 = vadd.f32 %v1354, %v1563
      %v1565 = vpop.f32.mrb[0].mxu0
      %v1566 = vpop.f32.mrb[0].mxu0
      %1567 = vdwg.mxu0
      %1568 = vmatprep.subr.bf16.mxu0 %v1466
      %1569 = vmatpush1.bf16.msra.mxu0 %v1465
      %1570 = vmatprep.subr.bf16.mxu0 %v1470
      %1571 = vmatpush1.bf16.msra.mxu0 %v1469
      %1572 = vmatprep.subr.bf16.mxu0 %v1474
      %1573 = vmatpush1.bf16.msra.mxu0 %v1473
      %1574 = vmatprep.subr.bf16.mxu0 %v1478
      %1575 = vmatpush1.bf16.msra.mxu0 %v1477
      %1576 = vmatprep.subr.bf16.mxu0 %v1482
      %1577 = vmatpush1.bf16.msra.mxu0 %v1481
      %1578 = vmatprep.subr.bf16.mxu0 %v1486
      %1579 = vmatpush1.bf16.msra.mxu0 %v1485
      %1580 = vmatprep.subr.bf16.mxu0 %v1490
      %1581 = vmatpush1.bf16.msra.mxu0 %v1489
      %1582 = vmatprep.subr.bf16.mxu0 %v1494
      %1583 = vmatpush1.bf16.msra.mxu0 %v1493
      %1584 = vmatprep.subr.bf16.mxu0 0
      %1585 = vmatpush1.bf16.msra.mxu0 0
      %1586 = vmatprep.subr.bf16.mxu0 0
      %1587 = vmatpush1.bf16.msra.mxu0 0
      %1588 = vmatprep.subr.bf16.mxu0 0
      %1589 = vmatpush1.bf16.msra.mxu0 0
      %1590 = vmatprep.subr.bf16.mxu0 0
      %1591 = vmatpush1.bf16.msra.mxu0 0
      %1592 = vmatprep.subr.bf16.mxu0 0
      %1593 = vmatpush1.bf16.msra.mxu0 0
      %1594 = vmatprep.subr.bf16.mxu0 0
      %1595 = vmatpush1.bf16.msra.mxu0 0
      %1596 = vmatprep.subr.bf16.mxu0 0
      %1597 = vmatpush1.bf16.msra.mxu0 0
      %1598 = vmatprep.subr.bf16.mxu0 0
      %1599 = vmatpush1.bf16.msra.mxu0 0
      %1600 = vmatprep.mubr.bf16.mxu0 0
      %1601 = vmatmul.mubr.bf16.gmra.mrb[0].mxu0 %v1312
      %v1602 = vpop.f32.mrb[0].mxu0
      %v1603 = vadd.f32 %v1358, %v1602
      %v1604 = vpop.f32.mrb[0].mxu0
      %v1605 = vadd.f32 %v1362, %v1604
      %v1606 = vpop.f32.mrb[0].mxu0
      %v1607 = vpop.f32.mrb[0].mxu0
      %1608 = vdwg.mxu0
      %v1609 = vmul.f32 %v1562, 0.5
      %v1610 = vmul.f32 %v1564, 0.5
      %v1611 = vmul.f32 %v1603, 0.5
      %v1612 = vmul.f32 %v1605, 0.5
      %v1613 = vmul.f32 %v1562, 0.044715
      %v1614 = vmul.f32 %v1564, 0.044715
      %v1615 = vmul.f32 %v1603, 0.044715
      %v1616 = vmul.f32 %v1605, 0.044715
      %v1617 = vmul.f32 %v1613, %v1562
      %v1618 = vmul.f32 %v1614, %v1564
      %v1619 = vmul.f32 %v1615, %v1603
      %v1620 = vmul.f32 %v1616, %v1605
      %v1621 = vmul.f32 %v1617, %v1562
      %v1622 = vmul.f32 %v1618, %v1564
      %v1623 = vmul.f32 %v1619, %v1603
      %v1624 = vmul.f32 %v1620, %v1605
      %v1625 = vadd.f32 %v1562, %v1621
      %v1626 = vadd.f32 %v1564, %v1622
      %v1627 = vadd.f32 %v1603, %v1623
      %v1628 = vadd.f32 %v1605, %v1624
      %v1629 = vmul.f32 %v1625, 0.7978846
      %v1630 = vmul.f32 %v1626, 0.7978846
      %v1631 = vmul.f32 %v1627, 0.7978846
      %v1632 = vmul.f32 %v1628, 0.7978846
      %v1633 = vtanh.pop %v1629
      %v1634 = vtanh.pop %v1630
      %v1635 = vtanh.pop %v1631
      %v1636 = vtanh.pop %v1632
      %v1637 = vadd.f32 %v1633, 1.0
      %v1638 = vadd.f32 %v1634, 1.0
      %v1639 = vadd.f32 %v1635, 1.0
      %v1640 = vadd.f32 %v1636, 1.0
      %v1641 = vmul.f32 %v1609, %v1637
      %v1642 = vmul.f32 %v1610, %v1638
      %v1643 = vmul.f32 %v1611, %v1639
      %v1644 = vmul.f32 %v1612, %v1640
      %v1645 = vpack.c.bf16 %v1641, %v1641
      %v1646 = vpack.c.bf16 %v1642, %v1642
      %v1647 = vpack.c.bf16 %v1643, %v1643
      %v1648 = vpack.c.bf16 %v1644, %v1644
      %v1649 = vld [vmem:[%s10] sm:$0xf]
      %v1650 = vld [vmem:[%s10 + $0x4] sm:$0xf]
      %v1651 = vld [vmem:[%s10 + $0x8] sm:$0xf]
      %v1652 = vld [vmem:[%s10 + $0xc] sm:$0xf]
      %v1653 = vld [vmem:[%s10 + $0x10] sm:$0xf]
      %v1654 = vld [vmem:[%s10 + $0x14] sm:$0xf]
      %v1655 = vld [vmem:[%s10 + $0x18] sm:$0xf]
      %v1656 = vld [vmem:[%s10 + $0x1c] sm:$0xf]
      %v1657 = vld [vmem:[%s10 + $0x20] sm:$0xf]
      %v1658 = vld [vmem:[%s10 + $0x24] sm:$0xf]
      %v1659 = vld [vmem:[%s10 + $0x28] sm:$0xf]
      %v1660 = vld [vmem:[%s10 + $0x2c] sm:$0xf]
      %v1661 = vld [vmem:[%s10 + $0x30] sm:$0xf]
      %v1662 = vld [vmem:[%s10 + $0x34] sm:$0xf]
      %v1663 = vld [vmem:[%s10 + $0x38] sm:$0xf]
      %v1664 = vld [vmem:[%s10 + $0x3c] sm:$0xf]
      %v1665 = vld [vmem:[%s10 + $0x40] sm:$0xf]
      %v1666 = vld [vmem:[%s10 + $0x44] sm:$0xf]
      %v1667 = vld [vmem:[%s10 + $0x48] sm:$0xf]
      %v1668 = vld [vmem:[%s10 + $0x4c] sm:$0xf]
      %v1669 = vld [vmem:[%s10 + $0x50] sm:$0xf]
      %v1670 = vld [vmem:[%s10 + $0x54] sm:$0xf]
      %v1671 = vld [vmem:[%s10 + $0x58] sm:$0xf]
      %v1672 = vld [vmem:[%s10 + $0x5c] sm:$0xf]
      %v1673 = vld [vmem:[%s10 + $0x60] sm:$0xf]
      %v1674 = vld [vmem:[%s10 + $0x64] sm:$0xf]
      %v1675 = vld [vmem:[%s10 + $0x68] sm:$0xf]
      %v1676 = vld [vmem:[%s10 + $0x6c] sm:$0xf]
      %v1677 = vld [vmem:[%s10 + $0x70] sm:$0xf]
      %v1678 = vld [vmem:[%s10 + $0x74] sm:$0xf]
      %v1679 = vld [vmem:[%s10 + $0x78] sm:$0xf]
      %v1680 = vld [vmem:[%s10 + $0x7c] sm:$0xf]
      %v1681 = vld [vmem:[%s10 + $0x80] sm:$0xf]
      %v1682 = vld [vmem:[%s10 + $0x84] sm:$0xf]
      %v1683 = vld [vmem:[%s10 + $0x88] sm:$0xf]
      %v1684 = vld [vmem:[%s10 + $0x8c] sm:$0xf]
      %v1685 = vld [vmem:[%s10 + $0x90] sm:$0xf]
      %v1686 = vld [vmem:[%s10 + $0x94] sm:$0xf]
      %v1687 = vld [vmem:[%s10 + $0x98] sm:$0xf]
      %v1688 = vld [vmem:[%s10 + $0x9c] sm:$0xf]
      %v1689 = vld [vmem:[%s10 + $0xa0] sm:$0xf]
      %v1690 = vld [vmem:[%s10 + $0xa4] sm:$0xf]
      %v1691 = vld [vmem:[%s10 + $0xa8] sm:$0xf]
      %v1692 = vld [vmem:[%s10 + $0xac] sm:$0xf]
      %v1693 = vld [vmem:[%s10 + $0xb0] sm:$0xf]
      %v1694 = vld [vmem:[%s10 + $0xb4] sm:$0xf]
      %v1695 = vld [vmem:[%s10 + $0xb8] sm:$0xf]
      %v1696 = vld [vmem:[%s10 + $0xbc] sm:$0xf]
      %v1697 = vld [vmem:[%s10 + $0xc0] sm:$0xf]
      %v1698 = vld [vmem:[%s10 + $0xc4] sm:$0xf]
      %v1699 = vld [vmem:[%s10 + $0xc8] sm:$0xf]
      %v1700 = vld [vmem:[%s10 + $0xcc] sm:$0xf]
      %v1701 = vld [vmem:[%s10 + $0xd0] sm:$0xf]
      %v1702 = vld [vmem:[%s10 + $0xd4] sm:$0xf]
      %v1703 = vld [vmem:[%s10 + $0xd8] sm:$0xf]
      %v1704 = vld [vmem:[%s10 + $0xdc] sm:$0xf]
      %v1705 = vld [vmem:[%s10 + $0xe0] sm:$0xf]
      %v1706 = vld [vmem:[%s10 + $0xe4] sm:$0xf]
      %v1707 = vld [vmem:[%s10 + $0xe8] sm:$0xf]
      %v1708 = vld [vmem:[%s10 + $0xec] sm:$0xf]
      %v1709 = vld [vmem:[%s10 + $0xf0] sm:$0xf]
      %v1710 = vld [vmem:[%s10 + $0xf4] sm:$0xf]
      %v1711 = vld [vmem:[%s10 + $0xf8] sm:$0xf]
      %v1712 = vld [vmem:[%s10 + $0xfc] sm:$0xf]
      %v1713 = vld [vmem:[%s11] sm:$0x1]
      %v1715 = vlaneseq
      %v1716 = vshrl.u32 %v1715, 7
      %v1717 = vsub.s32 0, %v1716
      %v1718 = vrot.slane %v1713, %v1717
      %v1784 = vunpack.c.l.b16 %v1649
      %v1785 = vunpack.c.l.b16 %v1650
      %v1786 = vunpack.c.l.b16 %v1651
      %v1787 = vunpack.c.l.b16 %v1652
      %v1788 = vunpack.c.l.b16 %v1653
      %v1789 = vunpack.c.l.b16 %v1654
      %v1790 = vunpack.c.l.b16 %v1655
      %v1791 = vunpack.c.l.b16 %v1656
      %v1792 = vunpack.c.l.b16 %v1657
      %v1793 = vunpack.c.l.b16 %v1658
      %v1794 = vunpack.c.l.b16 %v1659
      %v1795 = vunpack.c.l.b16 %v1660
      %v1796 = vunpack.c.l.b16 %v1661
      %v1797 = vunpack.c.l.b16 %v1662
      %v1798 = vunpack.c.l.b16 %v1663
      %v1799 = vunpack.c.l.b16 %v1664
      %v1800 = vunpack.c.l.b16 %v1665
      %v1801 = vunpack.c.l.b16 %v1666
      %v1802 = vunpack.c.l.b16 %v1667
      %v1803 = vunpack.c.l.b16 %v1668
      %v1804 = vunpack.c.l.b16 %v1669
      %v1805 = vunpack.c.l.b16 %v1670
      %v1806 = vunpack.c.l.b16 %v1671
      %v1807 = vunpack.c.l.b16 %v1672
      %v1808 = vunpack.c.l.b16 %v1673
      %v1809 = vunpack.c.l.b16 %v1674
      %v1810 = vunpack.c.l.b16 %v1675
      %v1811 = vunpack.c.l.b16 %v1676
      %v1812 = vunpack.c.l.b16 %v1677
      %v1813 = vunpack.c.l.b16 %v1678
      %v1814 = vunpack.c.l.b16 %v1679
      %v1815 = vunpack.c.l.b16 %v1680
      %v1816 = vunpack.c.l.b16 %v1681
      %v1817 = vunpack.c.l.b16 %v1682
      %v1818 = vunpack.c.l.b16 %v1683
      %v1819 = vunpack.c.l.b16 %v1684
      %v1820 = vunpack.c.l.b16 %v1685
      %v1821 = vunpack.c.l.b16 %v1686
      %v1822 = vunpack.c.l.b16 %v1687
      %v1823 = vunpack.c.l.b16 %v1688
      %v1824 = vunpack.c.l.b16 %v1689
      %v1825 = vunpack.c.l.b16 %v1690
      %v1826 = vunpack.c.l.b16 %v1691
      %v1827 = vunpack.c.l.b16 %v1692
      %v1828 = vunpack.c.l.b16 %v1693
      %v1829 = vunpack.c.l.b16 %v1694
      %v1830 = vunpack.c.l.b16 %v1695
      %v1831 = vunpack.c.l.b16 %v1696
      %v1832 = vunpack.c.l.b16 %v1697
      %v1833 = vunpack.c.l.b16 %v1698
      %v1834 = vunpack.c.l.b16 %v1699
      %v1835 = vunpack.c.l.b16 %v1700
      %v1836 = vunpack.c.l.b16 %v1701
      %v1837 = vunpack.c.l.b16 %v1702
      %v1838 = vunpack.c.l.b16 %v1703
      %v1839 = vunpack.c.l.b16 %v1704
      %v1840 = vunpack.c.l.b16 %v1705
      %v1841 = vunpack.c.l.b16 %v1706
      %v1842 = vunpack.c.l.b16 %v1707
      %v1843 = vunpack.c.l.b16 %v1708
      %v1844 = vunpack.c.l.b16 %v1709
      %v1845 = vunpack.c.l.b16 %v1710
      %v1846 = vunpack.c.l.b16 %v1711
      %v1847 = vunpack.c.l.b16 %v1712
      %v1848 = vpack.c.b16 %v1785, %v1784
      %v1849 = vpack.c.b16 %v1787, %v1786
      %v1850 = vpack.c.b16 %v1789, %v1788
      %v1851 = vpack.c.b16 %v1791, %v1790
      %v1852 = vpack.c.b16 %v1793, %v1792
      %v1853 = vpack.c.b16 %v1795, %v1794
      %v1854 = vpack.c.b16 %v1797, %v1796
      %v1855 = vpack.c.b16 %v1799, %v1798
      %v1856 = vpack.c.b16 %v1801, %v1800
      %v1857 = vpack.c.b16 %v1803, %v1802
      %v1858 = vpack.c.b16 %v1805, %v1804
      %v1859 = vpack.c.b16 %v1807, %v1806
      %v1860 = vpack.c.b16 %v1809, %v1808
      %v1861 = vpack.c.b16 %v1811, %v1810
      %v1862 = vpack.c.b16 %v1813, %v1812
      %v1863 = vpack.c.b16 %v1815, %v1814
      %v1864 = vpack.c.b16 %v1817, %v1816
      %v1865 = vpack.c.b16 %v1819, %v1818
      %v1866 = vpack.c.b16 %v1821, %v1820
      %v1867 = vpack.c.b16 %v1823, %v1822
      %v1868 = vpack.c.b16 %v1825, %v1824
      %v1869 = vpack.c.b16 %v1827, %v1826
      %v1870 = vpack.c.b16 %v1829, %v1828
      %v1871 = vpack.c.b16 %v1831, %v1830
      %v1872 = vpack.c.b16 %v1833, %v1832
      %v1873 = vpack.c.b16 %v1835, %v1834
      %v1874 = vpack.c.b16 %v1837, %v1836
      %v1875 = vpack.c.b16 %v1839, %v1838
      %v1876 = vpack.c.b16 %v1841, %v1840
      %v1877 = vpack.c.b16 %v1843, %v1842
      %v1878 = vpack.c.b16 %v1845, %v1844
      %v1879 = vpack.c.b16 %v1847, %v1846
      %1912 = vmatprep.subr.bf16.mxu0 0
      %1913 = vmatpush1.bf16.msra.mxu0 %v1848
      %1914 = vmatprep.subr.bf16.mxu0 0
      %1915 = vmatpush1.bf16.msra.mxu0 %v1849
      %1916 = vmatprep.subr.bf16.mxu0 0
      %1917 = vmatpush1.bf16.msra.mxu0 %v1850
      %1918 = vmatprep.subr.bf16.mxu0 0
      %1919 = vmatpush1.bf16.msra.mxu0 %v1851
      %1920 = vmatprep.subr.bf16.mxu0 0
      %1921 = vmatpush1.bf16.msra.mxu0 %v1852
      %1922 = vmatprep.subr.bf16.mxu0 0
      %1923 = vmatpush1.bf16.msra.mxu0 %v1853
      %1924 = vmatprep.subr.bf16.mxu0 0
      %1925 = vmatpush1.bf16.msra.mxu0 %v1854
      %1926 = vmatprep.subr.bf16.mxu0 0
      %1927 = vmatpush1.bf16.msra.mxu0 %v1855
      %1928 = vmatprep.subr.bf16.mxu0 0
      %1929 = vmatpush1.bf16.msra.mxu0 %v1856
      %1930 = vmatprep.subr.bf16.mxu0 0
      %1931 = vmatpush1.bf16.msra.mxu0 %v1857
      %1932 = vmatprep.subr.bf16.mxu0 0
      %1933 = vmatpush1.bf16.msra.mxu0 %v1858
      %1934 = vmatprep.subr.bf16.mxu0 0
      %1935 = vmatpush1.bf16.msra.mxu0 %v1859
      %1936 = vmatprep.subr.bf16.mxu0 0
      %1937 = vmatpush1.bf16.msra.mxu0 %v1860
      %1938 = vmatprep.subr.bf16.mxu0 0
      %1939 = vmatpush1.bf16.msra.mxu0 %v1861
      %1940 = vmatprep.subr.bf16.mxu0 0
      %1941 = vmatpush1.bf16.msra.mxu0 %v1862
      %1942 = vmatprep.subr.bf16.mxu0 0
      %1943 = vmatpush1.bf16.msra.mxu0 %v1863
      %1944 = vmatprep.mubr.bf16.mxu0 %v1646
      %1945 = vmatmul.mubr.bf16.gmra.mrb[0].mxu0 %v1645
      %v1946 = vpop.f32.mrb[0].mxu0
      %v1947 = vadd.f32 %v1718, %v1946
      %v1948 = vpop.f32.mrb[0].mxu0
      %v1949 = vpop.f32.mrb[0].mxu0
      %v1950 = vpop.f32.mrb[0].mxu0
      %1951 = vdwg.mxu0
      %1952 = vmatprep.subr.bf16.mxu0 0
      %1953 = vmatpush1.bf16.msra.mxu0 %v1864
      %1954 = vmatprep.subr.bf16.mxu0 0
      %1955 = vmatpush1.bf16.msra.mxu0 %v1865
      %1956 = vmatprep.subr.bf16.mxu0 0
      %1957 = vmatpush1.bf16.msra.mxu0 %v1866
      %1958 = vmatprep.subr.bf16.mxu0 0
      %1959 = vmatpush1.bf16.msra.mxu0 %v1867
      %1960 = vmatprep.subr.bf16.mxu0 0
      %1961 = vmatpush1.bf16.msra.mxu0 %v1868
      %1962 = vmatprep.subr.bf16.mxu0 0
      %1963 = vmatpush1.bf16.msra.mxu0 %v1869
      %1964 = vmatprep.subr.bf16.mxu0 0
      %1965 = vmatpush1.bf16.msra.mxu0 %v1870
      %1966 = vmatprep.subr.bf16.mxu0 0
      %1967 = vmatpush1.bf16.msra.mxu0 %v1871
      %1968 = vmatprep.subr.bf16.mxu0 0
      %1969 = vmatpush1.bf16.msra.mxu0 %v1872
      %1970 = vmatprep.subr.bf16.mxu0 0
      %1971 = vmatpush1.bf16.msra.mxu0 %v1873
      %1972 = vmatprep.subr.bf16.mxu0 0
      %1973 = vmatpush1.bf16.msra.mxu0 %v1874
      %1974 = vmatprep.subr.bf16.mxu0 0
      %1975 = vmatpush1.bf16.msra.mxu0 %v1875
      %1976 = vmatprep.subr.bf16.mxu0 0
      %1977 = vmatpush1.bf16.msra.mxu0 %v1876
      %1978 = vmatprep.subr.bf16.mxu0 0
      %1979 = vmatpush1.bf16.msra.mxu0 %v1877
      %1980 = vmatprep.subr.bf16.mxu0 0
      %1981 = vmatpush1.bf16.msra.mxu0 %v1878
      %1982 = vmatprep.subr.bf16.mxu0 0
      %1983 = vmatpush1.bf16.msra.mxu0 %v1879
      %1984 = vmatprep.mubr.bf16.mxu0 %v1648
      %1985 = vmatmul.mubr.bf16.gmra.mrb[0].mxu0 %v1647
      %v1986 = vpop.f32.mrb[0].mxu0
      %v1987 = vadd.f32 %v1947, %v1986
      %v1988 = vpop.f32.mrb[0].mxu0
      %v1989 = vpop.f32.mrb[0].mxu0
      %v1990 = vpop.f32.mrb[0].mxu0
      %1991 = vdwg.mxu0
      %v1992 = vadd.f32 %v1284, %v1987
      %v1993 = vpack.c.bf16 %v1992, %v1992
      %1994 = vst [vmem:[%s408] sm:$0xf] %v1993
      %p1995 = scmp.lt.s32.totalorder %s23, 1
      %s1996 = scalar_select %p1995, %s23, 1
      %s1997 = smul.addr %s1996, 4
      %s1998 = scalar_lea.vmem %s12, %s1997
      // Predicated region
      $region69: #{_lambda_.4} parent=67 // pred_check
        %p1999 = pneg %p298
      $region70: #{_lambda_.4} parent=67 // pred_check_branch
        %2001 = sbr.rel (%p1999) target = $region72
      $region71: #{_lambda_.4} parent=67 // pred_region
        _
      $region72: #{_lambda_.4} parent=67 // pred_fallthru
        _
    $region68: #{_lambda_.4} parent=5 // pred_fallthru
      _
    %p2002 = scmp.le.s32.totalorder 2, %s18
    // Predicated region
    $region73: #{_lambda_.4} parent=5 // pred_check
      %p2003 = pneg %p2002
    $region74: #{_lambda_.4} parent=5 // pred_check_branch
      %2005 = sbr.rel (%p2003) target = $region76
    $region75: #{_lambda_.4} parent=5 // pred_region
      %s2006 = ssub.s32 %s18, 2
      // Predicated region
      $region77: #{_lambda_.4} parent=75 // pred_check
        %p2007 = pneg %p304
      $region78: #{_lambda_.4} parent=75 // pred_check_branch
        %2009 = sbr.rel (%p2007) target = $region80
      $region79: #{_lambda_.4} parent=75 // pred_region
        %p2010 = scmp.lt.s32.totalorder %s24, 1
        %s2011 = scalar_select %p2010, %s24, 1
        %s2012 = smul.addr %s2011, 4
        %s2013 = scalar_lea.vmem %s12, %s2012
      $region80: #{_lambda_.4} parent=75 // pred_fallthru
        _
    $region76: #{_lambda_.4} parent=5 // pred_fallthru
      _
  $region6: #{_lambda_.4} parent=0 // loop_footer
    %s22 = sadd.s32 1, %s18
  $region7: #{_lambda_.4} parent=0 // loop_footer_branch
    %17 = sbr.rel target = $region3
  $region8: #{_lambda_.4} parent=0 // loop_exit
    _

</llo_original>
